<compile_context>
chip_gen: v5e
topology: v5e:2x2
jax: 0.10.0
libtpu: 0.0.40
codegen_flags: <defaults>
</compile_context>

<pallas_src>
import functools

import jax
import jax.numpy as jnp
from jax.experimental import pallas as pl
from jax.experimental.pallas import tpu as pltpu


# ---------------------------------------------------------------------------
# In-kernel building blocks
# ---------------------------------------------------------------------------
def _conv3_prelu(x, wcat, b, alpha, mask_p, mask_n):
    """3-tap 'same' conv over time (lane axis) + bias + PReLU, as ONE matmul.

    x      : [C, t]  f32   activation (time on lanes)
    wcat   : [C, 3C] bf16  stacked taps [W_prev | W_cur | W_next]
    b      : [C, 1]  f32   bias
    alpha  : [C, 1]  f32   PReLU slope
    mask_p : [C, t]  bool  col >= 1      (zero the wrapped first column)
    mask_n : [C, t]  bool  col <  t - 1  (zero the wrapped last column)
    """
    t = x.shape[1]
    # +-1 time shifts stay in-register (XLU roll is circular -> mask the wrap).
    x_p = jnp.where(mask_p, pltpu.roll(x, 1, axis=1), 0.0)          # x[j-1]
    x_n = jnp.where(mask_n, pltpu.roll(x, t - 1, axis=1), 0.0)      # x[j+1]
    xcat = jnp.concatenate([x_p, x, x_n], axis=0).astype(jnp.bfloat16)  # [3C, t]
    y = jnp.dot(wcat, xcat, preferred_element_type=jnp.float32) + b
    return jnp.where(y > 0, y, alpha * y)


def _convtasnet_kernel(blk_ref,
                       w0_ref, b0_ref,
                       we1_ref, be1_ref, ae1_ref,
                       we2_ref, be2_ref, ae2_ref,
                       wm_ref, bm_ref,
                       wd0_ref, bd0_ref, ad0_ref,
                       wd1_ref, bd1_ref, ad1_ref,
                       wfa_ref, wfb_ref,
                       o_ref, *, masks_num):
    """Whole ConvTasNet forward for one batch element (time on the lane axis)."""
    f = w0_ref.shape[0]                 # filters_num
    tp1 = blk_ref.shape[1]              # t + 1 stride-sized blocks
    t = tp1 - 1

    # ---- encoder: strided conv as one matmul on two shifted block views -----
    blk = blk_ref[...]                                            # [Cin*st, t+1] bf16
    xcat0 = jnp.concatenate([blk[:, :t], blk[:, 1:]], axis=0)     # [Cin*L, t]
    h = jnp.dot(w0_ref[...], xcat0,
                preferred_element_type=jnp.float32) + b0_ref[...]  # [F, t] f32

    # Boundary masks for the 3-tap convs: built ONCE, reused by every layer.
    col = jax.lax.broadcasted_iota(jnp.int32, (f, t), 1)
    mask_p = col >= 1
    mask_n = col < t - 1

    h = _conv3_prelu(h, we1_ref[...], be1_ref[...], ae1_ref[...], mask_p, mask_n)
    w = _conv3_prelu(h, we2_ref[...], be2_ref[...], ae2_ref[...], mask_p, mask_n)

    # ---- separation mask head (stand-in 1x1 conv + ReLU) --------------------
    w16 = w.astype(jnp.bfloat16)
    m = jnp.dot(wm_ref[...], w16, preferred_element_type=jnp.float32) + bm_ref[...]
    m = jnp.maximum(m, 0.0)                                        # [S*F, t]

    # ---- decoder per source (static loop; weights shared across sources) ----
    wd0 = wd0_ref[...]; bd0 = bd0_ref[...]; ad0 = ad0_ref[...]
    wd1 = wd1_ref[...]; bd1 = bd1_ref[...]; ad1 = ad1_ref[...]
    wfa = wfa_ref[...]; wfb = wfb_ref[...]
    rows = wfa.shape[0]                                            # out_c * stride
    zcol = jnp.zeros((rows, 1), jnp.float32)
    for s in range(masks_num):
        d = m[s * f:(s + 1) * f, :] * w                            # masked = m * w
        d = _conv3_prelu(d, wd0, bd0, ad0, mask_p, mask_n)
        d = _conv3_prelu(d, wd1, bd1, ad1, mask_p, mask_n)
        d16 = d.astype(jnp.bfloat16)
        # Final strided ConvTranspose1d + overlap-add, in-kernel:
        #   output block k = W_firstHalf @ d[:, k] + W_secondHalf @ d[:, k-1]
        c_a = jnp.dot(wfa, d16, preferred_element_type=jnp.float32)   # [rows, t]
        c_b = jnp.dot(wfb, d16, preferred_element_type=jnp.float32)   # [rows, t]
        out_s = (jnp.concatenate([c_a, zcol], axis=1)
                 + jnp.concatenate([zcol, c_b], axis=1))              # [rows, t+1]
        o_ref[s * rows:(s + 1) * rows, :] = out_s


# ---------------------------------------------------------------------------
# pallas_call wrapper
# ---------------------------------------------------------------------------
def _resident(arr):
    """Full-array BlockSpec for a small weight kept resident across grid steps."""
    zeros = (0,) * arr.ndim
    return pl.BlockSpec(arr.shape, lambda *_, _z=zeros: _z)


def convtasnet_fused(blk, weights, masks_num):
    B, cs, tp1 = blk.shape
    wfa = weights[-2]
    out_rows = masks_num * wfa.shape[0]                 # S * out_c * stride
    kernel = functools.partial(_convtasnet_kernel, masks_num=masks_num)
    return pl.pallas_call(
        kernel,
        out_shape=jax.ShapeDtypeStruct((B, out_rows, tp1), jnp.float32),
        grid=(B,),
        in_specs=[pl.BlockSpec((None, cs, tp1), lambda b: (b, 0, 0))]
                 + [_resident(a) for a in weights],
        out_specs=pl.BlockSpec((None, out_rows, tp1), lambda b: (b, 0, 0)),
        compiler_params=pltpu.CompilerParams(
            dimension_semantics=("parallel",),
            vmem_limit_bytes=48 * 1024 * 1024),
    )(blk, *weights)


# ---------------------------------------------------------------------------
# Parameter / weight-layout helpers (host-side glue)
# ---------------------------------------------------------------------------
def _col(v, n):
    """Scalar or per-channel parameter -> [n, 1] f32 column (PReLU slope / bias)."""
    v = jnp.asarray(v, jnp.float32).reshape(-1)
    if v.size == 1:
        v = jnp.broadcast_to(v, (n,))
    return v.reshape(n, 1)


def _conv3_cat(w):
    """Conv1d weight [Cout, Cin, 3] (pad=1) -> stacked [Cout, 3*Cin] = [W0|W1|W2]."""
    return jnp.concatenate([w[:, :, 0], w[:, :, 1], w[:, :, 2]], axis=1).astype(jnp.bfloat16)


def _convT3_cat(w):
    """ConvTranspose1d weight [Cin, Cout, 3] (stride=1, pad=1) as equivalent
    stacked conv taps: tap on x[j-1] is W[:,:,2].T, on x[j] W[:,:,1].T, x[j+1] W[:,:,0].T."""
    return jnp.concatenate([w[:, :, 2].T, w[:, :, 1].T, w[:, :, 0].T],
                           axis=1).astype(jnp.bfloat16)


def _uniform(key, shape, fan_in):
    bound = 1.0 / (fan_in ** 0.5)
    return jax.random.uniform(key, shape, jnp.float32, -bound, bound)


def init_params(key, in_channels, out_channels, masks_num, filters_num, filters_len):
    F_, L, S = filters_num, filters_len, masks_num
    k = jax.random.split(key, 16)
    p = {}
    # Encoder: Conv1d(in_c, F, L, stride=L//2), then 2 x (Conv1d(F, F, 3, pad=1) + PReLU)
    p["enc0_w"] = _uniform(k[0], (F_, in_channels, L), in_channels * L)
    p["enc0_b"] = _uniform(k[1], (F_,), in_channels * L)
    p["enc1_w"] = _uniform(k[2], (F_, F_, 3), F_ * 3)
    p["enc1_b"] = _uniform(k[3], (F_,), F_ * 3)
    p["enc1_alpha"] = jnp.float32(0.25)          # PReLU default init (learned scalar)
    p["enc2_w"] = _uniform(k[4], (F_, F_, 3), F_ * 3)
    p["enc2_b"] = _uniform(k[5], (F_,), F_ * 3)
    p["enc2_alpha"] = jnp.float32(0.25)
    # Separation mask head (stand-in for TDConvNetpp): 1x1 conv F -> S*F (+ ReLU)
    p["mask_w"] = _uniform(k[6], (S * F_, F_), F_)
    p["mask_b"] = _uniform(k[7], (S * F_,), F_)
    # Decoder: 2 x (ConvTranspose1d(F, F, 3, stride=1, pad=1) + PReLU), then
    #          ConvTranspose1d(F, out_c, L, stride=L//2, bias=True)
    p["dec0_w"] = _uniform(k[8], (F_, F_, 3), F_ * 3)
    p["dec0_b"] = _uniform(k[9], (F_,), F_ * 3)
    p["dec0_alpha"] = jnp.float32(0.25)
    p["dec1_w"] = _uniform(k[10], (F_, F_, 3), F_ * 3)
    p["dec1_b"] = _uniform(k[11], (F_,), F_ * 3)
    p["dec1_alpha"] = jnp.float32(0.25)
    p["decf_w"] = _uniform(k[12], (F_, out_channels, L), F_ * L)
    p["decf_b"] = _uniform(k[13], (out_channels,), F_ * L)
    return p


# ---------------------------------------------------------------------------
# ConvTasNet forward
# ---------------------------------------------------------------------------
def convtasnet_forward(params, x, *, masks_num, filters_num, filters_len, out_channels):
    """x: [Batch, in_channels, T] (PyTorch NCT).  Returns a list of `masks_num`
    arrays, each [Batch, out_channels, T_out] with T_out = (t - 1) * (L//2) + L."""
    assert x.ndim == 3
    p = params
    F_, L, S = filters_num, filters_len, masks_num
    stride = L // 2
    B, Cin, T = x.shape
    t = (T - L) // stride + 1
    bf = jnp.bfloat16

    # ---- contiguous framing into stride-sized blocks (no im2col gather) ------
    n_blk = t + 1                                                   # blocks used
    xb = x[:, :, :n_blk * stride].astype(jnp.float32)
    blk = xb.reshape(B, Cin, n_blk, stride)
    blk = jnp.transpose(blk, (0, 1, 3, 2)).reshape(B, Cin * stride, n_blk).astype(bf)

    # ---- encoder first-layer weight in the two-half (block) ordering ---------
    w0 = p["enc0_w"].reshape(F_, Cin, 2, stride)
    w0cat = jnp.concatenate(
        [w0[:, :, 0, :].reshape(F_, Cin * stride),
         w0[:, :, 1, :].reshape(F_, Cin * stride)], axis=1).astype(bf)

    # ---- final ConvTranspose1d split into first/second-half tap matrices -----
    wt = jnp.transpose(p["decf_w"], (1, 2, 0))                     # [out_c, L, F]
    wfa = wt[:, :stride, :].reshape(out_channels * stride, F_).astype(bf)
    wfb = wt[:, stride:, :].reshape(out_channels * stride, F_).astype(bf)

    weights = (
        w0cat, p["enc0_b"].reshape(F_, 1),
        _conv3_cat(p["enc1_w"]), p["enc1_b"].reshape(F_, 1), _col(p["enc1_alpha"], F_),
        _conv3_cat(p["enc2_w"]), p["enc2_b"].reshape(F_, 1), _col(p["enc2_alpha"], F_),
        p["mask_w"].astype(bf), p["mask_b"].reshape(S * F_, 1),
        _convT3_cat(p["dec0_w"]), p["dec0_b"].reshape(F_, 1), _col(p["dec0_alpha"], F_),
        _convT3_cat(p["dec1_w"]), p["dec1_b"].reshape(F_, 1), _col(p["dec1_alpha"], F_),
        wfa, wfb,
    )

    # ---- ONE fused kernel: encoder + mask + m*w + decoder + overlap-add ------
    out = convtasnet_fused(blk, weights, S)          # [B, S*out_c*stride, t+1] f32

    # ---- block layout -> waveform + output bias (small XLA glue) -------------
    y = out.reshape(B, S, out_channels, stride, t + 1)
    y = jnp.transpose(y, (0, 1, 2, 4, 3)).reshape(B, S, out_channels, (t + 1) * stride)
    y = y + p["decf_b"][None, None, :, None]
    return [y[:, s] for s in range(S)]


# ---------------------------------------------------------------------------
if __name__ == "__main__":
    in_channels, out_channels = 1, 1
    masks_num, filters_num, filters_len = 2, 16, 16
    B = 2
    stride = filters_len // 2
    t_frames = 128                                    # encoder frame count (one lane group)
    T = (t_frames - 1) * stride + filters_len         # 1032 samples -> round-trips exactly

    root = jax.random.PRNGKey(0)
    pkey, xkey = jax.random.split(root)
    params = init_params(pkey, in_channels, out_channels,
                         masks_num, filters_num, filters_len)
    x = jax.random.normal(xkey, (B, in_channels, T), jnp.float32)

    fwd = jax.jit(functools.partial(
        convtasnet_forward, masks_num=masks_num, filters_num=filters_num,
        filters_len=filters_len, out_channels=out_channels))
    sources = fwd(params, x)
    for src in sources:
        jax.block_until_ready(src)

    assert len(sources) == masks_num
    assert sources[0].shape == (B, out_channels, T)   # (t-1)*stride + L == T
    print("KERNEL_OK")
</pallas_src>

<mosaic_0001>
module attributes {stable_mosaic.version = 11 : i64} {
  func.func @_convtasnet_kernel(%arg0: i32, %arg1: memref<1x8x129xbf16, #tpu.memory_space<vmem>>, %arg2: memref<16x16xbf16, #tpu.memory_space<vmem>>, %arg3: memref<16x1xf32, #tpu.memory_space<vmem>>, %arg4: memref<16x48xbf16, #tpu.memory_space<vmem>>, %arg5: memref<16x1xf32, #tpu.memory_space<vmem>>, %arg6: memref<16x1xf32, #tpu.memory_space<vmem>>, %arg7: memref<16x48xbf16, #tpu.memory_space<vmem>>, %arg8: memref<16x1xf32, #tpu.memory_space<vmem>>, %arg9: memref<16x1xf32, #tpu.memory_space<vmem>>, %arg10: memref<32x16xbf16, #tpu.memory_space<vmem>>, %arg11: memref<32x1xf32, #tpu.memory_space<vmem>>, %arg12: memref<16x48xbf16, #tpu.memory_space<vmem>>, %arg13: memref<16x1xf32, #tpu.memory_space<vmem>>, %arg14: memref<16x1xf32, #tpu.memory_space<vmem>>, %arg15: memref<16x48xbf16, #tpu.memory_space<vmem>>, %arg16: memref<16x1xf32, #tpu.memory_space<vmem>>, %arg17: memref<16x1xf32, #tpu.memory_space<vmem>>, %arg18: memref<8x16xbf16, #tpu.memory_space<vmem>>, %arg19: memref<8x16xbf16, #tpu.memory_space<vmem>>, %arg20: memref<1x16x129xf32, #tpu.memory_space<vmem>>) attributes {dimension_semantics = [#tpu.dimension_semantics<parallel>], iteration_bounds = array<i64: 2>, scalar_prefetch = 0 : i64, scratch_operands = 0 : i64, tpu.core_type = #tpu.core_type<tc>, window_params = [{transform_indices = @transform_0, window_bounds = array<i64: 1, 8, 129>}, {pipeline_mode = #tpu.pipeline_mode<synchronous>, transform_indices = @transform_1, window_bounds = array<i64: 16, 16>}, {pipeline_mode = #tpu.pipeline_mode<synchronous>, transform_indices = @transform_2, window_bounds = array<i64: 16, 1>}, {pipeline_mode = #tpu.pipeline_mode<synchronous>, transform_indices = @transform_3, window_bounds = array<i64: 16, 48>}, {pipeline_mode = #tpu.pipeline_mode<synchronous>, transform_indices = @transform_4, window_bounds = array<i64: 16, 1>}, {pipeline_mode = #tpu.pipeline_mode<synchronous>, transform_indices = @transform_5, window_bounds = array<i64: 16, 1>}, {pipeline_mode = #tpu.pipeline_mode<synchronous>, transform_indices = @transform_6, window_bounds = array<i64: 16, 48>}, {pipeline_mode = #tpu.pipeline_mode<synchronous>, transform_indices = @transform_7, window_bounds = array<i64: 16, 1>}, {pipeline_mode = #tpu.pipeline_mode<synchronous>, transform_indices = @transform_8, window_bounds = array<i64: 16, 1>}, {pipeline_mode = #tpu.pipeline_mode<synchronous>, transform_indices = @transform_9, window_bounds = array<i64: 32, 16>}, {pipeline_mode = #tpu.pipeline_mode<synchronous>, transform_indices = @transform_10, window_bounds = array<i64: 32, 1>}, {pipeline_mode = #tpu.pipeline_mode<synchronous>, transform_indices = @transform_11, window_bounds = array<i64: 16, 48>}, {pipeline_mode = #tpu.pipeline_mode<synchronous>, transform_indices = @transform_12, window_bounds = array<i64: 16, 1>}, {pipeline_mode = #tpu.pipeline_mode<synchronous>, transform_indices = @transform_13, window_bounds = array<i64: 16, 1>}, {pipeline_mode = #tpu.pipeline_mode<synchronous>, transform_indices = @transform_14, window_bounds = array<i64: 16, 48>}, {pipeline_mode = #tpu.pipeline_mode<synchronous>, transform_indices = @transform_15, window_bounds = array<i64: 16, 1>}, {pipeline_mode = #tpu.pipeline_mode<synchronous>, transform_indices = @transform_16, window_bounds = array<i64: 16, 1>}, {pipeline_mode = #tpu.pipeline_mode<synchronous>, transform_indices = @transform_17, window_bounds = array<i64: 8, 16>}, {pipeline_mode = #tpu.pipeline_mode<synchronous>, transform_indices = @transform_18, window_bounds = array<i64: 8, 16>}, {transform_indices = @transform_19, window_bounds = array<i64: 1, 16, 129>}]} {
    %c0 = arith.constant 0 : index
    %c0_0 = arith.constant 0 : index
    %c0_1 = arith.constant 0 : index
    %0 = vector.load %arg1[%c0, %c0_0, %c0_1] : memref<1x8x129xbf16, #tpu.memory_space<vmem>>, vector<1x8x129xbf16>
    %1 = vector.shape_cast %0 : vector<1x8x129xbf16> to vector<8x129xbf16>
    %2 = vector.extract_strided_slice %1 {offsets = [0, 0], sizes = [8, 128], strides = [1, 1]} : vector<8x129xbf16> to vector<8x128xbf16>
    %3 = vector.extract_strided_slice %1 {offsets = [0, 1], sizes = [8, 128], strides = [1, 1]} : vector<8x129xbf16> to vector<8x128xbf16>
    %4 = tpu.concatenate %2, %3 in 0 : vector<8x128xbf16>, vector<8x128xbf16> -> vector<16x128xbf16>
    %c0_2 = arith.constant 0 : index
    %c0_3 = arith.constant 0 : index
    %5 = vector.load %arg2[%c0_2, %c0_3] : memref<16x16xbf16, #tpu.memory_space<vmem>>, vector<16x16xbf16>
    %cst = arith.constant dense<0.000000e+00> : vector<16x128xf32>
    %6 = tpu.matmul %5, %4, %cst {dimension_numbers = #tpu.dot_dimension_numbers<[1], [0], [0], [1], [0, 0, 1, 1], [], []>} : vector<16x16xbf16>, vector<16x128xbf16>, vector<16x128xf32> -> vector<16x128xf32>
    %c0_4 = arith.constant 0 : index
    %c0_5 = arith.constant 0 : index
    %7 = vector.load %arg3[%c0_4, %c0_5] : memref<16x1xf32, #tpu.memory_space<vmem>>, vector<16x1xf32>
    %8 = vector.broadcast %7 : vector<16x1xf32> to vector<16x128xf32>
    %9 = arith.addf %6, %8 : vector<16x128xf32>
    %10 = tpu.iota {dimensions = array<i32: 1>} : vector<16x128xi32>
    %c1_i32 = arith.constant 1 : i32
    %11 = vector.broadcast %c1_i32 : i32 to vector<16x128xi32>
    %12 = arith.cmpi sge, %10, %11 : vector<16x128xi32>
    %c127_i32 = arith.constant 127 : i32
    %13 = vector.broadcast %c127_i32 : i32 to vector<16x128xi32>
    %14 = arith.cmpi slt, %10, %13 : vector<16x128xi32>
    %c0_6 = arith.constant 0 : index
    %c0_7 = arith.constant 0 : index
    %15 = vector.load %arg4[%c0_6, %c0_7] : memref<16x48xbf16, #tpu.memory_space<vmem>>, vector<16x48xbf16>
    %c0_8 = arith.constant 0 : index
    %c0_9 = arith.constant 0 : index
    %16 = vector.load %arg5[%c0_8, %c0_9] : memref<16x1xf32, #tpu.memory_space<vmem>>, vector<16x1xf32>
    %c0_10 = arith.constant 0 : index
    %c0_11 = arith.constant 0 : index
    %17 = vector.load %arg6[%c0_10, %c0_11] : memref<16x1xf32, #tpu.memory_space<vmem>>, vector<16x1xf32>
    %c1_i32_12 = arith.constant 1 : i32
    %18 = tpu.dynamic_rotate %9 by %c1_i32_12 dim 1 : vector<16x128xf32>, i32 -> vector<16x128xf32>
    %cst_13 = arith.constant 0.000000e+00 : f32
    %19 = vector.broadcast %cst_13 : f32 to vector<16x128xf32>
    %20 = arith.select %12, %18, %19 : vector<16x128xi1>, vector<16x128xf32>
    %c127_i32_14 = arith.constant 127 : i32
    %21 = tpu.dynamic_rotate %9 by %c127_i32_14 dim 1 : vector<16x128xf32>, i32 -> vector<16x128xf32>
    %cst_15 = arith.constant 0.000000e+00 : f32
    %22 = vector.broadcast %cst_15 : f32 to vector<16x128xf32>
    %23 = arith.select %14, %21, %22 : vector<16x128xi1>, vector<16x128xf32>
    %24 = tpu.concatenate %20, %9, %23 in 0 : vector<16x128xf32>, vector<16x128xf32>, vector<16x128xf32> -> vector<48x128xf32>
    %25 = arith.truncf %24 : vector<48x128xf32> to vector<48x128xbf16>
    %cst_16 = arith.constant dense<0.000000e+00> : vector<16x128xf32>
    %26 = tpu.matmul %15, %25, %cst_16 {dimension_numbers = #tpu.dot_dimension_numbers<[1], [0], [0], [1], [0, 0, 1, 1], [], []>} : vector<16x48xbf16>, vector<48x128xbf16>, vector<16x128xf32> -> vector<16x128xf32>
    %27 = vector.broadcast %16 : vector<16x1xf32> to vector<16x128xf32>
    %28 = arith.addf %26, %27 : vector<16x128xf32>
    %cst_17 = arith.constant 0.000000e+00 : f32
    %29 = vector.broadcast %cst_17 : f32 to vector<16x128xf32>
    %30 = arith.cmpf ogt, %28, %29 : vector<16x128xf32>
    %31 = vector.broadcast %17 : vector<16x1xf32> to vector<16x128xf32>
    %32 = arith.mulf %31, %28 : vector<16x128xf32>
    %33 = arith.select %30, %28, %32 : vector<16x128xi1>, vector<16x128xf32>
    %c0_18 = arith.constant 0 : index
    %c0_19 = arith.constant 0 : index
    %34 = vector.load %arg7[%c0_18, %c0_19] : memref<16x48xbf16, #tpu.memory_space<vmem>>, vector<16x48xbf16>
    %c0_20 = arith.constant 0 : index
    %c0_21 = arith.constant 0 : index
    %35 = vector.load %arg8[%c0_20, %c0_21] : memref<16x1xf32, #tpu.memory_space<vmem>>, vector<16x1xf32>
    %c0_22 = arith.constant 0 : index
    %c0_23 = arith.constant 0 : index
    %36 = vector.load %arg9[%c0_22, %c0_23] : memref<16x1xf32, #tpu.memory_space<vmem>>, vector<16x1xf32>
    %c1_i32_24 = arith.constant 1 : i32
    %37 = tpu.dynamic_rotate %33 by %c1_i32_24 dim 1 : vector<16x128xf32>, i32 -> vector<16x128xf32>
    %cst_25 = arith.constant 0.000000e+00 : f32
    %38 = vector.broadcast %cst_25 : f32 to vector<16x128xf32>
    %39 = arith.select %12, %37, %38 : vector<16x128xi1>, vector<16x128xf32>
    %c127_i32_26 = arith.constant 127 : i32
    %40 = tpu.dynamic_rotate %33 by %c127_i32_26 dim 1 : vector<16x128xf32>, i32 -> vector<16x128xf32>
    %cst_27 = arith.constant 0.000000e+00 : f32
    %41 = vector.broadcast %cst_27 : f32 to vector<16x128xf32>
    %42 = arith.select %14, %40, %41 : vector<16x128xi1>, vector<16x128xf32>
    %43 = tpu.concatenate %39, %33, %42 in 0 : vector<16x128xf32>, vector<16x128xf32>, vector<16x128xf32> -> vector<48x128xf32>
    %44 = arith.truncf %43 : vector<48x128xf32> to vector<48x128xbf16>
    %cst_28 = arith.constant dense<0.000000e+00> : vector<16x128xf32>
    %45 = tpu.matmul %34, %44, %cst_28 {dimension_numbers = #tpu.dot_dimension_numbers<[1], [0], [0], [1], [0, 0, 1, 1], [], []>} : vector<16x48xbf16>, vector<48x128xbf16>, vector<16x128xf32> -> vector<16x128xf32>
    %46 = vector.broadcast %35 : vector<16x1xf32> to vector<16x128xf32>
    %47 = arith.addf %45, %46 : vector<16x128xf32>
    %cst_29 = arith.constant 0.000000e+00 : f32
    %48 = vector.broadcast %cst_29 : f32 to vector<16x128xf32>
    %49 = arith.cmpf ogt, %47, %48 : vector<16x128xf32>
    %50 = vector.broadcast %36 : vector<16x1xf32> to vector<16x128xf32>
    %51 = arith.mulf %50, %47 : vector<16x128xf32>
    %52 = arith.select %49, %47, %51 : vector<16x128xi1>, vector<16x128xf32>
    %53 = arith.truncf %52 : vector<16x128xf32> to vector<16x128xbf16>
    %c0_30 = arith.constant 0 : index
    %c0_31 = arith.constant 0 : index
    %54 = vector.load %arg10[%c0_30, %c0_31] : memref<32x16xbf16, #tpu.memory_space<vmem>>, vector<32x16xbf16>
    %cst_32 = arith.constant dense<0.000000e+00> : vector<32x128xf32>
    %55 = tpu.matmul %54, %53, %cst_32 {dimension_numbers = #tpu.dot_dimension_numbers<[1], [0], [0], [1], [0, 0, 1, 1], [], []>} : vector<32x16xbf16>, vector<16x128xbf16>, vector<32x128xf32> -> vector<32x128xf32>
    %c0_33 = arith.constant 0 : index
    %c0_34 = arith.constant 0 : index
    %56 = vector.load %arg11[%c0_33, %c0_34] : memref<32x1xf32, #tpu.memory_space<vmem>>, vector<32x1xf32>
    %57 = vector.broadcast %56 : vector<32x1xf32> to vector<32x128xf32>
    %58 = arith.addf %55, %57 : vector<32x128xf32>
    %cst_35 = arith.constant 0.000000e+00 : f32
    %59 = vector.broadcast %cst_35 : f32 to vector<32x128xf32>
    %60 = arith.maximumf %58, %59 : vector<32x128xf32>
    %c0_36 = arith.constant 0 : index
    %c0_37 = arith.constant 0 : index
    %61 = vector.load %arg12[%c0_36, %c0_37] : memref<16x48xbf16, #tpu.memory_space<vmem>>, vector<16x48xbf16>
    %c0_38 = arith.constant 0 : index
    %c0_39 = arith.constant 0 : index
    %62 = vector.load %arg13[%c0_38, %c0_39] : memref<16x1xf32, #tpu.memory_space<vmem>>, vector<16x1xf32>
    %c0_40 = arith.constant 0 : index
    %c0_41 = arith.constant 0 : index
    %63 = vector.load %arg14[%c0_40, %c0_41] : memref<16x1xf32, #tpu.memory_space<vmem>>, vector<16x1xf32>
    %c0_42 = arith.constant 0 : index
    %c0_43 = arith.constant 0 : index
    %64 = vector.load %arg15[%c0_42, %c0_43] : memref<16x48xbf16, #tpu.memory_space<vmem>>, vector<16x48xbf16>
    %c0_44 = arith.constant 0 : index
    %c0_45 = arith.constant 0 : index
    %65 = vector.load %arg16[%c0_44, %c0_45] : memref<16x1xf32, #tpu.memory_space<vmem>>, vector<16x1xf32>
    %c0_46 = arith.constant 0 : index
    %c0_47 = arith.constant 0 : index
    %66 = vector.load %arg17[%c0_46, %c0_47] : memref<16x1xf32, #tpu.memory_space<vmem>>, vector<16x1xf32>
    %c0_48 = arith.constant 0 : index
    %c0_49 = arith.constant 0 : index
    %67 = vector.load %arg18[%c0_48, %c0_49] : memref<8x16xbf16, #tpu.memory_space<vmem>>, vector<8x16xbf16>
    %c0_50 = arith.constant 0 : index
    %c0_51 = arith.constant 0 : index
    %68 = vector.load %arg19[%c0_50, %c0_51] : memref<8x16xbf16, #tpu.memory_space<vmem>>, vector<8x16xbf16>
    %cst_52 = arith.constant 0.000000e+00 : f32
    %69 = vector.broadcast %cst_52 : f32 to vector<8x1xf32>
    %70 = vector.extract_strided_slice %60 {offsets = [0, 0], sizes = [16, 128], strides = [1, 1]} : vector<32x128xf32> to vector<16x128xf32>
    %71 = arith.mulf %70, %52 : vector<16x128xf32>
    %c1_i32_53 = arith.constant 1 : i32
    %72 = tpu.dynamic_rotate %71 by %c1_i32_53 dim 1 : vector<16x128xf32>, i32 -> vector<16x128xf32>
    %cst_54 = arith.constant 0.000000e+00 : f32
    %73 = vector.broadcast %cst_54 : f32 to vector<16x128xf32>
    %74 = arith.select %12, %72, %73 : vector<16x128xi1>, vector<16x128xf32>
    %c127_i32_55 = arith.constant 127 : i32
    %75 = tpu.dynamic_rotate %71 by %c127_i32_55 dim 1 : vector<16x128xf32>, i32 -> vector<16x128xf32>
    %cst_56 = arith.constant 0.000000e+00 : f32
    %76 = vector.broadcast %cst_56 : f32 to vector<16x128xf32>
    %77 = arith.select %14, %75, %76 : vector<16x128xi1>, vector<16x128xf32>
    %78 = tpu.concatenate %74, %71, %77 in 0 : vector<16x128xf32>, vector<16x128xf32>, vector<16x128xf32> -> vector<48x128xf32>
    %79 = arith.truncf %78 : vector<48x128xf32> to vector<48x128xbf16>
    %cst_57 = arith.constant dense<0.000000e+00> : vector<16x128xf32>
    %80 = tpu.matmul %61, %79, %cst_57 {dimension_numbers = #tpu.dot_dimension_numbers<[1], [0], [0], [1], [0, 0, 1, 1], [], []>} : vector<16x48xbf16>, vector<48x128xbf16>, vector<16x128xf32> -> vector<16x128xf32>
    %81 = vector.broadcast %62 : vector<16x1xf32> to vector<16x128xf32>
    %82 = arith.addf %80, %81 : vector<16x128xf32>
    %cst_58 = arith.constant 0.000000e+00 : f32
    %83 = vector.broadcast %cst_58 : f32 to vector<16x128xf32>
    %84 = arith.cmpf ogt, %82, %83 : vector<16x128xf32>
    %85 = vector.broadcast %63 : vector<16x1xf32> to vector<16x128xf32>
    %86 = arith.mulf %85, %82 : vector<16x128xf32>
    %87 = arith.select %84, %82, %86 : vector<16x128xi1>, vector<16x128xf32>
    %c1_i32_59 = arith.constant 1 : i32
    %88 = tpu.dynamic_rotate %87 by %c1_i32_59 dim 1 : vector<16x128xf32>, i32 -> vector<16x128xf32>
    %cst_60 = arith.constant 0.000000e+00 : f32
    %89 = vector.broadcast %cst_60 : f32 to vector<16x128xf32>
    %90 = arith.select %12, %88, %89 : vector<16x128xi1>, vector<16x128xf32>
    %c127_i32_61 = arith.constant 127 : i32
    %91 = tpu.dynamic_rotate %87 by %c127_i32_61 dim 1 : vector<16x128xf32>, i32 -> vector<16x128xf32>
    %cst_62 = arith.constant 0.000000e+00 : f32
    %92 = vector.broadcast %cst_62 : f32 to vector<16x128xf32>
    %93 = arith.select %14, %91, %92 : vector<16x128xi1>, vector<16x128xf32>
    %94 = tpu.concatenate %90, %87, %93 in 0 : vector<16x128xf32>, vector<16x128xf32>, vector<16x128xf32> -> vector<48x128xf32>
    %95 = arith.truncf %94 : vector<48x128xf32> to vector<48x128xbf16>
    %cst_63 = arith.constant dense<0.000000e+00> : vector<16x128xf32>
    %96 = tpu.matmul %64, %95, %cst_63 {dimension_numbers = #tpu.dot_dimension_numbers<[1], [0], [0], [1], [0, 0, 1, 1], [], []>} : vector<16x48xbf16>, vector<48x128xbf16>, vector<16x128xf32> -> vector<16x128xf32>
    %97 = vector.broadcast %65 : vector<16x1xf32> to vector<16x128xf32>
    %98 = arith.addf %96, %97 : vector<16x128xf32>
    %cst_64 = arith.constant 0.000000e+00 : f32
    %99 = vector.broadcast %cst_64 : f32 to vector<16x128xf32>
    %100 = arith.cmpf ogt, %98, %99 : vector<16x128xf32>
    %101 = vector.broadcast %66 : vector<16x1xf32> to vector<16x128xf32>
    %102 = arith.mulf %101, %98 : vector<16x128xf32>
    %103 = arith.select %100, %98, %102 : vector<16x128xi1>, vector<16x128xf32>
    %104 = arith.truncf %103 : vector<16x128xf32> to vector<16x128xbf16>
    %cst_65 = arith.constant dense<0.000000e+00> : vector<8x128xf32>
    %105 = tpu.matmul %67, %104, %cst_65 {dimension_numbers = #tpu.dot_dimension_numbers<[1], [0], [0], [1], [0, 0, 1, 1], [], []>} : vector<8x16xbf16>, vector<16x128xbf16>, vector<8x128xf32> -> vector<8x128xf32>
    %cst_66 = arith.constant dense<0.000000e+00> : vector<8x128xf32>
    %106 = tpu.matmul %68, %104, %cst_66 {dimension_numbers = #tpu.dot_dimension_numbers<[1], [0], [0], [1], [0, 0, 1, 1], [], []>} : vector<8x16xbf16>, vector<16x128xbf16>, vector<8x128xf32> -> vector<8x128xf32>
    %107 = tpu.concatenate %105, %69 in 1 : vector<8x128xf32>, vector<8x1xf32> -> vector<8x129xf32>
    %108 = tpu.concatenate %69, %106 in 1 : vector<8x1xf32>, vector<8x128xf32> -> vector<8x129xf32>
    %109 = arith.addf %107, %108 : vector<8x129xf32>
    %c0_67 = arith.constant 0 : index
    %c0_68 = arith.constant 0 : index
    %c0_69 = arith.constant 0 : index
    %110 = vector.load %arg20[%c0_67, %c0_68, %c0_69] : memref<1x16x129xf32, #tpu.memory_space<vmem>>, vector<1x8x129xf32>
    %111 = vector.shape_cast %110 : vector<1x8x129xf32> to vector<8x129xf32>
    %112 = vector.shape_cast %109 : vector<8x129xf32> to vector<1x8x129xf32>
    tpu.vector_store %arg20[%c0_67, %c0_68, %c0_69], %112 {strides = array<i32>} : memref<1x16x129xf32, #tpu.memory_space<vmem>>, vector<1x8x129xf32>,
    %113 = vector.extract_strided_slice %60 {offsets = [16, 0], sizes = [16, 128], strides = [1, 1]} : vector<32x128xf32> to vector<16x128xf32>
    %114 = arith.mulf %113, %52 : vector<16x128xf32>
    %c1_i32_70 = arith.constant 1 : i32
    %115 = tpu.dynamic_rotate %114 by %c1_i32_70 dim 1 : vector<16x128xf32>, i32 -> vector<16x128xf32>
    %cst_71 = arith.constant 0.000000e+00 : f32
    %116 = vector.broadcast %cst_71 : f32 to vector<16x128xf32>
    %117 = arith.select %12, %115, %116 : vector<16x128xi1>, vector<16x128xf32>
    %c127_i32_72 = arith.constant 127 : i32
    %118 = tpu.dynamic_rotate %114 by %c127_i32_72 dim 1 : vector<16x128xf32>, i32 -> vector<16x128xf32>
    %cst_73 = arith.constant 0.000000e+00 : f32
    %119 = vector.broadcast %cst_73 : f32 to vector<16x128xf32>
    %120 = arith.select %14, %118, %119 : vector<16x128xi1>, vector<16x128xf32>
    %121 = tpu.concatenate %117, %114, %120 in 0 : vector<16x128xf32>, vector<16x128xf32>, vector<16x128xf32> -> vector<48x128xf32>
    %122 = arith.truncf %121 : vector<48x128xf32> to vector<48x128xbf16>
    %cst_74 = arith.constant dense<0.000000e+00> : vector<16x128xf32>
    %123 = tpu.matmul %61, %122, %cst_74 {dimension_numbers = #tpu.dot_dimension_numbers<[1], [0], [0], [1], [0, 0, 1, 1], [], []>} : vector<16x48xbf16>, vector<48x128xbf16>, vector<16x128xf32> -> vector<16x128xf32>
    %124 = vector.broadcast %62 : vector<16x1xf32> to vector<16x128xf32>
    %125 = arith.addf %123, %124 : vector<16x128xf32>
    %cst_75 = arith.constant 0.000000e+00 : f32
    %126 = vector.broadcast %cst_75 : f32 to vector<16x128xf32>
    %127 = arith.cmpf ogt, %125, %126 : vector<16x128xf32>
    %128 = vector.broadcast %63 : vector<16x1xf32> to vector<16x128xf32>
    %129 = arith.mulf %128, %125 : vector<16x128xf32>
    %130 = arith.select %127, %125, %129 : vector<16x128xi1>, vector<16x128xf32>
    %c1_i32_76 = arith.constant 1 : i32
    %131 = tpu.dynamic_rotate %130 by %c1_i32_76 dim 1 : vector<16x128xf32>, i32 -> vector<16x128xf32>
    %cst_77 = arith.constant 0.000000e+00 : f32
    %132 = vector.broadcast %cst_77 : f32 to vector<16x128xf32>
    %133 = arith.select %12, %131, %132 : vector<16x128xi1>, vector<16x128xf32>
    %c127_i32_78 = arith.constant 127 : i32
    %134 = tpu.dynamic_rotate %130 by %c127_i32_78 dim 1 : vector<16x128xf32>, i32 -> vector<16x128xf32>
    %cst_79 = arith.constant 0.000000e+00 : f32
    %135 = vector.broadcast %cst_79 : f32 to vector<16x128xf32>
    %136 = arith.select %14, %134, %135 : vector<16x128xi1>, vector<16x128xf32>
    %137 = tpu.concatenate %133, %130, %136 in 0 : vector<16x128xf32>, vector<16x128xf32>, vector<16x128xf32> -> vector<48x128xf32>
    %138 = arith.truncf %137 : vector<48x128xf32> to vector<48x128xbf16>
    %cst_80 = arith.constant dense<0.000000e+00> : vector<16x128xf32>
    %139 = tpu.matmul %64, %138, %cst_80 {dimension_numbers = #tpu.dot_dimension_numbers<[1], [0], [0], [1], [0, 0, 1, 1], [], []>} : vector<16x48xbf16>, vector<48x128xbf16>, vector<16x128xf32> -> vector<16x128xf32>
    %140 = vector.broadcast %65 : vector<16x1xf32> to vector<16x128xf32>
    %141 = arith.addf %139, %140 : vector<16x128xf32>
    %cst_81 = arith.constant 0.000000e+00 : f32
    %142 = vector.broadcast %cst_81 : f32 to vector<16x128xf32>
    %143 = arith.cmpf ogt, %141, %142 : vector<16x128xf32>
    %144 = vector.broadcast %66 : vector<16x1xf32> to vector<16x128xf32>
    %145 = arith.mulf %144, %141 : vector<16x128xf32>
    %146 = arith.select %143, %141, %145 : vector<16x128xi1>, vector<16x128xf32>
    %147 = arith.truncf %146 : vector<16x128xf32> to vector<16x128xbf16>
    %cst_82 = arith.constant dense<0.000000e+00> : vector<8x128xf32>
    %148 = tpu.matmul %67, %147, %cst_82 {dimension_numbers = #tpu.dot_dimension_numbers<[1], [0], [0], [1], [0, 0, 1, 1], [], []>} : vector<8x16xbf16>, vector<16x128xbf16>, vector<8x128xf32> -> vector<8x128xf32>
    %cst_83 = arith.constant dense<0.000000e+00> : vector<8x128xf32>
    %149 = tpu.matmul %68, %147, %cst_83 {dimension_numbers = #tpu.dot_dimension_numbers<[1], [0], [0], [1], [0, 0, 1, 1], [], []>} : vector<8x16xbf16>, vector<16x128xbf16>, vector<8x128xf32> -> vector<8x128xf32>
    %150 = tpu.concatenate %148, %69 in 1 : vector<8x128xf32>, vector<8x1xf32> -> vector<8x129xf32>
    %151 = tpu.concatenate %69, %149 in 1 : vector<8x1xf32>, vector<8x128xf32> -> vector<8x129xf32>
    %152 = arith.addf %150, %151 : vector<8x129xf32>
    %c0_84 = arith.constant 0 : index
    %c8 = arith.constant 8 : index
    %c0_85 = arith.constant 0 : index
    %153 = vector.load %arg20[%c0_84, %c8, %c0_85] : memref<1x16x129xf32, #tpu.memory_space<vmem>>, vector<1x8x129xf32>
    %154 = vector.shape_cast %153 : vector<1x8x129xf32> to vector<8x129xf32>
    %155 = vector.shape_cast %152 : vector<8x129xf32> to vector<1x8x129xf32>
    tpu.vector_store %arg20[%c0_84, %c8, %c0_85], %155 {strides = array<i32>} : memref<1x16x129xf32, #tpu.memory_space<vmem>>, vector<1x8x129xf32>,
    return
  }
  func.func @transform_0(%arg0: i32) -> (i32, i32, i32) {
    %c0_i32 = arith.constant 0 : i32
    %c0_i32_0 = arith.constant 0 : i32
    %c0_i32_1 = arith.constant 0 : i32
    return %arg0, %c0_i32, %c0_i32_0 : i32, i32, i32
  }
  func.func @transform_1(%arg0: i32) -> (i32, i32) {
    %c0_i32 = arith.constant 0 : i32
    %c0_i32_0 = arith.constant 0 : i32
    %c0_i32_1 = arith.constant 0 : i32
    return %c0_i32, %c0_i32_0 : i32, i32
  }
  func.func @transform_2(%arg0: i32) -> (i32, i32) {
    %c0_i32 = arith.constant 0 : i32
    %c0_i32_0 = arith.constant 0 : i32
    %c0_i32_1 = arith.constant 0 : i32
    return %c0_i32, %c0_i32_0 : i32, i32
  }
  func.func @transform_3(%arg0: i32) -> (i32, i32) {
    %c0_i32 = arith.constant 0 : i32
    %c0_i32_0 = arith.constant 0 : i32
    %c0_i32_1 = arith.constant 0 : i32
    return %c0_i32, %c0_i32_0 : i32, i32
  }
  func.func @transform_4(%arg0: i32) -> (i32, i32) {
    %c0_i32 = arith.constant 0 : i32
    %c0_i32_0 = arith.constant 0 : i32
    %c0_i32_1 = arith.constant 0 : i32
    return %c0_i32, %c0_i32_0 : i32, i32
  }
  func.func @transform_5(%arg0: i32) -> (i32, i32) {
    %c0_i32 = arith.constant 0 : i32
    %c0_i32_0 = arith.constant 0 : i32
    %c0_i32_1 = arith.constant 0 : i32
    return %c0_i32, %c0_i32_0 : i32, i32
  }
  func.func @transform_6(%arg0: i32) -> (i32, i32) {
    %c0_i32 = arith.constant 0 : i32
    %c0_i32_0 = arith.constant 0 : i32
    %c0_i32_1 = arith.constant 0 : i32
    return %c0_i32, %c0_i32_0 : i32, i32
  }
  func.func @transform_7(%arg0: i32) -> (i32, i32) {
    %c0_i32 = arith.constant 0 : i32
    %c0_i32_0 = arith.constant 0 : i32
    %c0_i32_1 = arith.constant 0 : i32
    return %c0_i32, %c0_i32_0 : i32, i32
  }
  func.func @transform_8(%arg0: i32) -> (i32, i32) {
    %c0_i32 = arith.constant 0 : i32
    %c0_i32_0 = arith.constant 0 : i32
    %c0_i32_1 = arith.constant 0 : i32
    return %c0_i32, %c0_i32_0 : i32, i32
  }
  func.func @transform_9(%arg0: i32) -> (i32, i32) {
    %c0_i32 = arith.constant 0 : i32
    %c0_i32_0 = arith.constant 0 : i32
    %c0_i32_1 = arith.constant 0 : i32
    return %c0_i32, %c0_i32_0 : i32, i32
  }
  func.func @transform_10(%arg0: i32) -> (i32, i32) {
    %c0_i32 = arith.constant 0 : i32
    %c0_i32_0 = arith.constant 0 : i32
    %c0_i32_1 = arith.constant 0 : i32
    return %c0_i32, %c0_i32_0 : i32, i32
  }
  func.func @transform_11(%arg0: i32) -> (i32, i32) {
    %c0_i32 = arith.constant 0 : i32
    %c0_i32_0 = arith.constant 0 : i32
    %c0_i32_1 = arith.constant 0 : i32
    return %c0_i32, %c0_i32_0 : i32, i32
  }
  func.func @transform_12(%arg0: i32) -> (i32, i32) {
    %c0_i32 = arith.constant 0 : i32
    %c0_i32_0 = arith.constant 0 : i32
    %c0_i32_1 = arith.constant 0 : i32
    return %c0_i32, %c0_i32_0 : i32, i32
  }
  func.func @transform_13(%arg0: i32) -> (i32, i32) {
    %c0_i32 = arith.constant 0 : i32
    %c0_i32_0 = arith.constant 0 : i32
    %c0_i32_1 = arith.constant 0 : i32
    return %c0_i32, %c0_i32_0 : i32, i32
  }
  func.func @transform_14(%arg0: i32) -> (i32, i32) {
    %c0_i32 = arith.constant 0 : i32
    %c0_i32_0 = arith.constant 0 : i32
    %c0_i32_1 = arith.constant 0 : i32
    return %c0_i32, %c0_i32_0 : i32, i32
  }
  func.func @transform_15(%arg0: i32) -> (i32, i32) {
    %c0_i32 = arith.constant 0 : i32
    %c0_i32_0 = arith.constant 0 : i32
    %c0_i32_1 = arith.constant 0 : i32
    return %c0_i32, %c0_i32_0 : i32, i32
  }
  func.func @transform_16(%arg0: i32) -> (i32, i32) {
    %c0_i32 = arith.constant 0 : i32
    %c0_i32_0 = arith.constant 0 : i32
    %c0_i32_1 = arith.constant 0 : i32
    return %c0_i32, %c0_i32_0 : i32, i32
  }
  func.func @transform_17(%arg0: i32) -> (i32, i32) {
    %c0_i32 = arith.constant 0 : i32
    %c0_i32_0 = arith.constant 0 : i32
    %c0_i32_1 = arith.constant 0 : i32
    return %c0_i32, %c0_i32_0 : i32, i32
  }
  func.func @transform_18(%arg0: i32) -> (i32, i32) {
    %c0_i32 = arith.constant 0 : i32
    %c0_i32_0 = arith.constant 0 : i32
    %c0_i32_1 = arith.constant 0 : i32
    return %c0_i32, %c0_i32_0 : i32, i32
  }
  func.func @transform_19(%arg0: i32) -> (i32, i32, i32) {
    %c0_i32 = arith.constant 0 : i32
    %c0_i32_0 = arith.constant 0 : i32
    %c0_i32_1 = arith.constant 0 : i32
    return %arg0, %c0_i32, %c0_i32_0 : i32, i32, i32
  }
}

</mosaic_0001>

<llo_original>
// kernel: convtasnet_forward.1
$region0: #{convtasnet_forward.1}
  #allocation0 [shape = 'u32[]', space=smem, size = 0x4, offset = 0x4, fixed_abs, tag = 'smem constant byte address 0x4 - core index']
  #allocation1 [shape = 'u32[72,128]{1,0:T(1,128)}', space=vmem, size = 0x9000, scoped, tag = 'internal scratch']
  %s0 = inlined_call_operand.vmem [shape: bf16[2,8,129], index: 0, kind: input, shape index: {}]
  %s1 = inlined_call_operand.vmem [shape: bf16[16,16], index: 1, kind: input, shape index: {}]
  %s2 = inlined_call_operand.vmem [shape: f32[16,1], index: 2, kind: input, shape index: {}]
  %s3 = inlined_call_operand.vmem [shape: bf16[16,48], index: 3, kind: input, shape index: {}]
  %s4 = inlined_call_operand.vmem [shape: f32[16,1], index: 4, kind: input, shape index: {}]
  %s5 = inlined_call_operand.vmem [shape: f32[16,1], index: 5, kind: input, shape index: {}]
  %s6 = inlined_call_operand.vmem [shape: bf16[16,48], index: 6, kind: input, shape index: {}]
  %s7 = inlined_call_operand.vmem [shape: f32[16,1], index: 7, kind: input, shape index: {}]
  %s8 = inlined_call_operand.vmem [shape: f32[16,1], index: 8, kind: input, shape index: {}]
  %s9 = inlined_call_operand.vmem [shape: bf16[32,16], index: 9, kind: input, shape index: {}]
  %s10 = inlined_call_operand.vmem [shape: f32[32,1], index: 10, kind: input, shape index: {}]
  %s11 = inlined_call_operand.vmem [shape: bf16[16,48], index: 11, kind: input, shape index: {}]
  %s12 = inlined_call_operand.vmem [shape: f32[16,1], index: 12, kind: input, shape index: {}]
  %s13 = inlined_call_operand.vmem [shape: f32[16,1], index: 13, kind: input, shape index: {}]
  %s14 = inlined_call_operand.vmem [shape: bf16[16,48], index: 14, kind: input, shape index: {}]
  %s15 = inlined_call_operand.vmem [shape: f32[16,1], index: 15, kind: input, shape index: {}]
  %s16 = inlined_call_operand.vmem [shape: f32[16,1], index: 16, kind: input, shape index: {}]
  %s17 = inlined_call_operand.vmem [shape: bf16[8,16], index: 17, kind: input, shape index: {}]
  %s18 = inlined_call_operand.vmem [shape: bf16[8,16], index: 18, kind: input, shape index: {}]
  %s19 = inlined_call_operand.vmem [shape: f32[2,16,129], index: 19, kind: output, shape index: {}]
  %s20 = sld [smem:[#allocation0]]
  $region109: #{convtasnet_forward.1} parent=0
    _
  %s22 = ssub.s32 1, %s20
  %s23 = scalar_select 0, %s22, %s20
  loop: start=0, step=1, limit=4
  $region2: #{convtasnet_forward.1} parent=0 // loop_pre_header
    _
  $region3: #{convtasnet_forward.1} parent=0 // loop_header
    %s25 = sphi 0, %s29
    %p26 = scmp.ge.s32.totalorder %s25, 4
    %s35 = sphi 0, %s37
    %s38 = sphi 0, %s35
    %s39 = sphi 0, %s38
    %s55 = sphi 0, %s39
    %s59 = sphi 0, %s59
    %s61 = sphi 0, %s59
    %s62 = sphi 0, %s61
    %s76 = sphi 0, %s62
    %s80 = sphi 0, %s80
    %s82 = sphi 0, %s80
    %s83 = sphi 0, %s82
    %s97 = sphi 0, %s83
    %s101 = sphi 0, %s101
    %s103 = sphi 0, %s101
    %s104 = sphi 0, %s103
    %s118 = sphi 0, %s104
    %s122 = sphi 0, %s122
    %s124 = sphi 0, %s122
    %s125 = sphi 0, %s124
    %s139 = sphi 0, %s125
    %s143 = sphi 0, %s143
    %s145 = sphi 0, %s143
    %s146 = sphi 0, %s145
    %s160 = sphi 0, %s146
    %s164 = sphi 0, %s164
    %s166 = sphi 0, %s164
    %s167 = sphi 0, %s166
    %s181 = sphi 0, %s167
    %s185 = sphi 0, %s185
    %s187 = sphi 0, %s185
    %s188 = sphi 0, %s187
    %s202 = sphi 0, %s188
    %s206 = sphi 0, %s206
    %s208 = sphi 0, %s206
    %s209 = sphi 0, %s208
    %s223 = sphi 0, %s209
    %s227 = sphi 0, %s227
    %s229 = sphi 0, %s227
    %s230 = sphi 0, %s229
    %s244 = sphi 0, %s230
    %s248 = sphi 0, %s248
    %s250 = sphi 0, %s248
    %s251 = sphi 0, %s250
    %s265 = sphi 0, %s251
    %s269 = sphi 0, %s269
    %s271 = sphi 0, %s269
    %s272 = sphi 0, %s271
    %s286 = sphi 0, %s272
    %s290 = sphi 0, %s290
    %s292 = sphi 0, %s290
    %s293 = sphi 0, %s292
    %s307 = sphi 0, %s293
    %s311 = sphi 0, %s311
    %s313 = sphi 0, %s311
    %s314 = sphi 0, %s313
    %s328 = sphi 0, %s314
    %s332 = sphi 0, %s332
    %s334 = sphi 0, %s332
    %s335 = sphi 0, %s334
    %s349 = sphi 0, %s335
    %s353 = sphi 0, %s353
    %s355 = sphi 0, %s353
    %s356 = sphi 0, %s355
    %s370 = sphi 0, %s356
    %s374 = sphi 0, %s374
    %s376 = sphi 0, %s374
    %s377 = sphi 0, %s376
    %s391 = sphi 0, %s377
    %s395 = sphi 0, %s395
    %s397 = sphi 0, %s395
    %s398 = sphi 0, %s397
    %s412 = sphi 0, %s398
    %s416 = sphi 0, %s416
    %s418 = sphi 0, %s416
    %s419 = sphi 0, %s418
    %s433 = sphi 0, %s419
    %s439 = sphi 0, %s441
    %s442 = sphi 0, %s439
    %s443 = sphi 0, %s442
    %s459 = sphi 0, %s443
  $region4: #{convtasnet_forward.1} parent=0 // loop_header_branch
    %28 = sbr.rel (%p26) target = $region8
  $region5: #{convtasnet_forward.1} parent=0 // loop_body
    %s30 = ssub.s32 %s25, 1
    %s31 = ssub.s32 %s25, 2
    %s32 = sadd.s32 %s25, 1
    %s33 = ssub.s32 %s25, %s32
    %p34 = scmp.eq.s32.totalorder %s33, 0
    %s36 = sadd.s32 %s35, 1
    %s37 = scalar_select %p34, %s35, %s36
    %p40 = pneg %p34
    %p41 = scmp.eq.s32.totalorder %s25, 1
    %p42 = por %p40, %p41
    %p43 = scmp.ne.s32.totalorder %s35, %s38
    %p44 = scmp.eq.s32.totalorder %s25, 0
    %p45 = por %p43, %p44
    %p46 = scmp.ne.s32.totalorder %s35, %s38
    %p47 = scmp.eq.s32.totalorder %s30, 1
    %p48 = por %p46, %p47
    %p49 = scmp.ne.s32.totalorder %s38, %s39
    %p50 = scmp.eq.s32.totalorder %s30, 0
    %p51 = por %p49, %p50
    %p52 = scmp.ne.s32.totalorder %s38, %s39
    %p53 = scmp.eq.s32.totalorder %s31, 1
    %p54 = por %p52, %p53
    %p56 = scmp.ne.s32.totalorder %s39, %s55
    %p57 = scmp.eq.s32.totalorder %s31, 0
    %p58 = por %p56, %p57
    %s60 = sadd.s32 %s59, 1
    %p63 = scmp.eq.s32.totalorder %s25, 1
    %p64 = scmp.ne.s32.totalorder %s59, %s61
    %p65 = scmp.eq.s32.totalorder %s25, 0
    %p66 = por %p64, %p65
    %p67 = scmp.ne.s32.totalorder %s59, %s61
    %p68 = scmp.eq.s32.totalorder %s30, 1
    %p69 = por %p67, %p68
    %p70 = scmp.ne.s32.totalorder %s61, %s62
    %p71 = scmp.eq.s32.totalorder %s30, 0
    %p72 = por %p70, %p71
    %p73 = scmp.ne.s32.totalorder %s61, %s62
    %p74 = scmp.eq.s32.totalorder %s31, 1
    %p75 = por %p73, %p74
    %p77 = scmp.ne.s32.totalorder %s62, %s76
    %p78 = scmp.eq.s32.totalorder %s31, 0
    %p79 = por %p77, %p78
    %s81 = sadd.s32 %s80, 1
    %p84 = scmp.eq.s32.totalorder %s25, 1
    %p85 = scmp.ne.s32.totalorder %s80, %s82
    %p86 = scmp.eq.s32.totalorder %s25, 0
    %p87 = por %p85, %p86
    %p88 = scmp.ne.s32.totalorder %s80, %s82
    %p89 = scmp.eq.s32.totalorder %s30, 1
    %p90 = por %p88, %p89
    %p91 = scmp.ne.s32.totalorder %s82, %s83
    %p92 = scmp.eq.s32.totalorder %s30, 0
    %p93 = por %p91, %p92
    %p94 = scmp.ne.s32.totalorder %s82, %s83
    %p95 = scmp.eq.s32.totalorder %s31, 1
    %p96 = por %p94, %p95
    %p98 = scmp.ne.s32.totalorder %s83, %s97
    %p99 = scmp.eq.s32.totalorder %s31, 0
    %p100 = por %p98, %p99
    %s102 = sadd.s32 %s101, 1
    %p105 = scmp.eq.s32.totalorder %s25, 1
    %p106 = scmp.ne.s32.totalorder %s101, %s103
    %p107 = scmp.eq.s32.totalorder %s25, 0
    %p108 = por %p106, %p107
    %p109 = scmp.ne.s32.totalorder %s101, %s103
    %p110 = scmp.eq.s32.totalorder %s30, 1
    %p111 = por %p109, %p110
    %p112 = scmp.ne.s32.totalorder %s103, %s104
    %p113 = scmp.eq.s32.totalorder %s30, 0
    %p114 = por %p112, %p113
    %p115 = scmp.ne.s32.totalorder %s103, %s104
    %p116 = scmp.eq.s32.totalorder %s31, 1
    %p117 = por %p115, %p116
    %p119 = scmp.ne.s32.totalorder %s104, %s118
    %p120 = scmp.eq.s32.totalorder %s31, 0
    %p121 = por %p119, %p120
    %s123 = sadd.s32 %s122, 1
    %p126 = scmp.eq.s32.totalorder %s25, 1
    %p127 = scmp.ne.s32.totalorder %s122, %s124
    %p128 = scmp.eq.s32.totalorder %s25, 0
    %p129 = por %p127, %p128
    %p130 = scmp.ne.s32.totalorder %s122, %s124
    %p131 = scmp.eq.s32.totalorder %s30, 1
    %p132 = por %p130, %p131
    %p133 = scmp.ne.s32.totalorder %s124, %s125
    %p134 = scmp.eq.s32.totalorder %s30, 0
    %p135 = por %p133, %p134
    %p136 = scmp.ne.s32.totalorder %s124, %s125
    %p137 = scmp.eq.s32.totalorder %s31, 1
    %p138 = por %p136, %p137
    %p140 = scmp.ne.s32.totalorder %s125, %s139
    %p141 = scmp.eq.s32.totalorder %s31, 0
    %p142 = por %p140, %p141
    %s144 = sadd.s32 %s143, 1
    %p147 = scmp.eq.s32.totalorder %s25, 1
    %p148 = scmp.ne.s32.totalorder %s143, %s145
    %p149 = scmp.eq.s32.totalorder %s25, 0
    %p150 = por %p148, %p149
    %p151 = scmp.ne.s32.totalorder %s143, %s145
    %p152 = scmp.eq.s32.totalorder %s30, 1
    %p153 = por %p151, %p152
    %p154 = scmp.ne.s32.totalorder %s145, %s146
    %p155 = scmp.eq.s32.totalorder %s30, 0
    %p156 = por %p154, %p155
    %p157 = scmp.ne.s32.totalorder %s145, %s146
    %p158 = scmp.eq.s32.totalorder %s31, 1
    %p159 = por %p157, %p158
    %p161 = scmp.ne.s32.totalorder %s146, %s160
    %p162 = scmp.eq.s32.totalorder %s31, 0
    %p163 = por %p161, %p162
    %s165 = sadd.s32 %s164, 1
    %p168 = scmp.eq.s32.totalorder %s25, 1
    %p169 = scmp.ne.s32.totalorder %s164, %s166
    %p170 = scmp.eq.s32.totalorder %s25, 0
    %p171 = por %p169, %p170
    %p172 = scmp.ne.s32.totalorder %s164, %s166
    %p173 = scmp.eq.s32.totalorder %s30, 1
    %p174 = por %p172, %p173
    %p175 = scmp.ne.s32.totalorder %s166, %s167
    %p176 = scmp.eq.s32.totalorder %s30, 0
    %p177 = por %p175, %p176
    %p178 = scmp.ne.s32.totalorder %s166, %s167
    %p179 = scmp.eq.s32.totalorder %s31, 1
    %p180 = por %p178, %p179
    %p182 = scmp.ne.s32.totalorder %s167, %s181
    %p183 = scmp.eq.s32.totalorder %s31, 0
    %p184 = por %p182, %p183
    %s186 = sadd.s32 %s185, 1
    %p189 = scmp.eq.s32.totalorder %s25, 1
    %p190 = scmp.ne.s32.totalorder %s185, %s187
    %p191 = scmp.eq.s32.totalorder %s25, 0
    %p192 = por %p190, %p191
    %p193 = scmp.ne.s32.totalorder %s185, %s187
    %p194 = scmp.eq.s32.totalorder %s30, 1
    %p195 = por %p193, %p194
    %p196 = scmp.ne.s32.totalorder %s187, %s188
    %p197 = scmp.eq.s32.totalorder %s30, 0
    %p198 = por %p196, %p197
    %p199 = scmp.ne.s32.totalorder %s187, %s188
    %p200 = scmp.eq.s32.totalorder %s31, 1
    %p201 = por %p199, %p200
    %p203 = scmp.ne.s32.totalorder %s188, %s202
    %p204 = scmp.eq.s32.totalorder %s31, 0
    %p205 = por %p203, %p204
    %s207 = sadd.s32 %s206, 1
    %p210 = scmp.eq.s32.totalorder %s25, 1
    %p211 = scmp.ne.s32.totalorder %s206, %s208
    %p212 = scmp.eq.s32.totalorder %s25, 0
    %p213 = por %p211, %p212
    %p214 = scmp.ne.s32.totalorder %s206, %s208
    %p215 = scmp.eq.s32.totalorder %s30, 1
    %p216 = por %p214, %p215
    %p217 = scmp.ne.s32.totalorder %s208, %s209
    %p218 = scmp.eq.s32.totalorder %s30, 0
    %p219 = por %p217, %p218
    %p220 = scmp.ne.s32.totalorder %s208, %s209
    %p221 = scmp.eq.s32.totalorder %s31, 1
    %p222 = por %p220, %p221
    %p224 = scmp.ne.s32.totalorder %s209, %s223
    %p225 = scmp.eq.s32.totalorder %s31, 0
    %p226 = por %p224, %p225
    %s228 = sadd.s32 %s227, 1
    %p231 = scmp.eq.s32.totalorder %s25, 1
    %p232 = scmp.ne.s32.totalorder %s227, %s229
    %p233 = scmp.eq.s32.totalorder %s25, 0
    %p234 = por %p232, %p233
    %p235 = scmp.ne.s32.totalorder %s227, %s229
    %p236 = scmp.eq.s32.totalorder %s30, 1
    %p237 = por %p235, %p236
    %p238 = scmp.ne.s32.totalorder %s229, %s230
    %p239 = scmp.eq.s32.totalorder %s30, 0
    %p240 = por %p238, %p239
    %p241 = scmp.ne.s32.totalorder %s229, %s230
    %p242 = scmp.eq.s32.totalorder %s31, 1
    %p243 = por %p241, %p242
    %p245 = scmp.ne.s32.totalorder %s230, %s244
    %p246 = scmp.eq.s32.totalorder %s31, 0
    %p247 = por %p245, %p246
    %s249 = sadd.s32 %s248, 1
    %p252 = scmp.eq.s32.totalorder %s25, 1
    %p253 = scmp.ne.s32.totalorder %s248, %s250
    %p254 = scmp.eq.s32.totalorder %s25, 0
    %p255 = por %p253, %p254
    %p256 = scmp.ne.s32.totalorder %s248, %s250
    %p257 = scmp.eq.s32.totalorder %s30, 1
    %p258 = por %p256, %p257
    %p259 = scmp.ne.s32.totalorder %s250, %s251
    %p260 = scmp.eq.s32.totalorder %s30, 0
    %p261 = por %p259, %p260
    %p262 = scmp.ne.s32.totalorder %s250, %s251
    %p263 = scmp.eq.s32.totalorder %s31, 1
    %p264 = por %p262, %p263
    %p266 = scmp.ne.s32.totalorder %s251, %s265
    %p267 = scmp.eq.s32.totalorder %s31, 0
    %p268 = por %p266, %p267
    %s270 = sadd.s32 %s269, 1
    %p273 = scmp.eq.s32.totalorder %s25, 1
    %p274 = scmp.ne.s32.totalorder %s269, %s271
    %p275 = scmp.eq.s32.totalorder %s25, 0
    %p276 = por %p274, %p275
    %p277 = scmp.ne.s32.totalorder %s269, %s271
    %p278 = scmp.eq.s32.totalorder %s30, 1
    %p279 = por %p277, %p278
    %p280 = scmp.ne.s32.totalorder %s271, %s272
    %p281 = scmp.eq.s32.totalorder %s30, 0
    %p282 = por %p280, %p281
    %p283 = scmp.ne.s32.totalorder %s271, %s272
    %p284 = scmp.eq.s32.totalorder %s31, 1
    %p285 = por %p283, %p284
    %p287 = scmp.ne.s32.totalorder %s272, %s286
    %p288 = scmp.eq.s32.totalorder %s31, 0
    %p289 = por %p287, %p288
    %s291 = sadd.s32 %s290, 1
    %p294 = scmp.eq.s32.totalorder %s25, 1
    %p295 = scmp.ne.s32.totalorder %s290, %s292
    %p296 = scmp.eq.s32.totalorder %s25, 0
    %p297 = por %p295, %p296
    %p298 = scmp.ne.s32.totalorder %s290, %s292
    %p299 = scmp.eq.s32.totalorder %s30, 1
    %p300 = por %p298, %p299
    %p301 = scmp.ne.s32.totalorder %s292, %s293
    %p302 = scmp.eq.s32.totalorder %s30, 0
    %p303 = por %p301, %p302
    %p304 = scmp.ne.s32.totalorder %s292, %s293
    %p305 = scmp.eq.s32.totalorder %s31, 1
    %p306 = por %p304, %p305
    %p308 = scmp.ne.s32.totalorder %s293, %s307
    %p309 = scmp.eq.s32.totalorder %s31, 0
    %p310 = por %p308, %p309
    %s312 = sadd.s32 %s311, 1
    %p315 = scmp.eq.s32.totalorder %s25, 1
    %p316 = scmp.ne.s32.totalorder %s311, %s313
    %p317 = scmp.eq.s32.totalorder %s25, 0
    %p318 = por %p316, %p317
    %p319 = scmp.ne.s32.totalorder %s311, %s313
    %p320 = scmp.eq.s32.totalorder %s30, 1
    %p321 = por %p319, %p320
    %p322 = scmp.ne.s32.totalorder %s313, %s314
    %p323 = scmp.eq.s32.totalorder %s30, 0
    %p324 = por %p322, %p323
    %p325 = scmp.ne.s32.totalorder %s313, %s314
    %p326 = scmp.eq.s32.totalorder %s31, 1
    %p327 = por %p325, %p326
    %p329 = scmp.ne.s32.totalorder %s314, %s328
    %p330 = scmp.eq.s32.totalorder %s31, 0
    %p331 = por %p329, %p330
    %s333 = sadd.s32 %s332, 1
    %p336 = scmp.eq.s32.totalorder %s25, 1
    %p337 = scmp.ne.s32.totalorder %s332, %s334
    %p338 = scmp.eq.s32.totalorder %s25, 0
    %p339 = por %p337, %p338
    %p340 = scmp.ne.s32.totalorder %s332, %s334
    %p341 = scmp.eq.s32.totalorder %s30, 1
    %p342 = por %p340, %p341
    %p343 = scmp.ne.s32.totalorder %s334, %s335
    %p344 = scmp.eq.s32.totalorder %s30, 0
    %p345 = por %p343, %p344
    %p346 = scmp.ne.s32.totalorder %s334, %s335
    %p347 = scmp.eq.s32.totalorder %s31, 1
    %p348 = por %p346, %p347
    %p350 = scmp.ne.s32.totalorder %s335, %s349
    %p351 = scmp.eq.s32.totalorder %s31, 0
    %p352 = por %p350, %p351
    %s354 = sadd.s32 %s353, 1
    %p357 = scmp.eq.s32.totalorder %s25, 1
    %p358 = scmp.ne.s32.totalorder %s353, %s355
    %p359 = scmp.eq.s32.totalorder %s25, 0
    %p360 = por %p358, %p359
    %p361 = scmp.ne.s32.totalorder %s353, %s355
    %p362 = scmp.eq.s32.totalorder %s30, 1
    %p363 = por %p361, %p362
    %p364 = scmp.ne.s32.totalorder %s355, %s356
    %p365 = scmp.eq.s32.totalorder %s30, 0
    %p366 = por %p364, %p365
    %p367 = scmp.ne.s32.totalorder %s355, %s356
    %p368 = scmp.eq.s32.totalorder %s31, 1
    %p369 = por %p367, %p368
    %p371 = scmp.ne.s32.totalorder %s356, %s370
    %p372 = scmp.eq.s32.totalorder %s31, 0
    %p373 = por %p371, %p372
    %s375 = sadd.s32 %s374, 1
    %p378 = scmp.eq.s32.totalorder %s25, 1
    %p379 = scmp.ne.s32.totalorder %s374, %s376
    %p380 = scmp.eq.s32.totalorder %s25, 0
    %p381 = por %p379, %p380
    %p382 = scmp.ne.s32.totalorder %s374, %s376
    %p383 = scmp.eq.s32.totalorder %s30, 1
    %p384 = por %p382, %p383
    %p385 = scmp.ne.s32.totalorder %s376, %s377
    %p386 = scmp.eq.s32.totalorder %s30, 0
    %p387 = por %p385, %p386
    %p388 = scmp.ne.s32.totalorder %s376, %s377
    %p389 = scmp.eq.s32.totalorder %s31, 1
    %p390 = por %p388, %p389
    %p392 = scmp.ne.s32.totalorder %s377, %s391
    %p393 = scmp.eq.s32.totalorder %s31, 0
    %p394 = por %p392, %p393
    %s396 = sadd.s32 %s395, 1
    %p399 = scmp.eq.s32.totalorder %s25, 1
    %p400 = scmp.ne.s32.totalorder %s395, %s397
    %p401 = scmp.eq.s32.totalorder %s25, 0
    %p402 = por %p400, %p401
    %p403 = scmp.ne.s32.totalorder %s395, %s397
    %p404 = scmp.eq.s32.totalorder %s30, 1
    %p405 = por %p403, %p404
    %p406 = scmp.ne.s32.totalorder %s397, %s398
    %p407 = scmp.eq.s32.totalorder %s30, 0
    %p408 = por %p406, %p407
    %p409 = scmp.ne.s32.totalorder %s397, %s398
    %p410 = scmp.eq.s32.totalorder %s31, 1
    %p411 = por %p409, %p410
    %p413 = scmp.ne.s32.totalorder %s398, %s412
    %p414 = scmp.eq.s32.totalorder %s31, 0
    %p415 = por %p413, %p414
    %s417 = sadd.s32 %s416, 1
    %p420 = scmp.eq.s32.totalorder %s25, 1
    %p421 = scmp.ne.s32.totalorder %s416, %s418
    %p422 = scmp.eq.s32.totalorder %s25, 0
    %p423 = por %p421, %p422
    %p424 = scmp.ne.s32.totalorder %s416, %s418
    %p425 = scmp.eq.s32.totalorder %s30, 1
    %p426 = por %p424, %p425
    %p427 = scmp.ne.s32.totalorder %s418, %s419
    %p428 = scmp.eq.s32.totalorder %s30, 0
    %p429 = por %p427, %p428
    %p430 = scmp.ne.s32.totalorder %s418, %s419
    %p431 = scmp.eq.s32.totalorder %s31, 1
    %p432 = por %p430, %p431
    %p434 = scmp.ne.s32.totalorder %s419, %s433
    %p435 = scmp.eq.s32.totalorder %s31, 0
    %p436 = por %p434, %p435
    %s437 = ssub.s32 %s25, %s32
    %p438 = scmp.eq.s32.totalorder %s437, 0
    %s440 = sadd.s32 %s439, 1
    %s441 = scalar_select %p438, %s439, %s440
    %p444 = pneg %p438
    %p445 = scmp.eq.s32.totalorder %s25, 1
    %p446 = por %p444, %p445
    %p447 = scmp.ne.s32.totalorder %s439, %s442
    %p448 = scmp.eq.s32.totalorder %s25, 0
    %p449 = por %p447, %p448
    %p450 = scmp.ne.s32.totalorder %s439, %s442
    %p451 = scmp.eq.s32.totalorder %s30, 1
    %p452 = por %p450, %p451
    %p453 = scmp.ne.s32.totalorder %s442, %s443
    %p454 = scmp.eq.s32.totalorder %s30, 0
    %p455 = por %p453, %p454
    %p456 = scmp.ne.s32.totalorder %s442, %s443
    %p457 = scmp.eq.s32.totalorder %s31, 1
    %p458 = por %p456, %p457
    %p460 = scmp.ne.s32.totalorder %s443, %s459
    %p461 = scmp.eq.s32.totalorder %s31, 0
    %p462 = por %p460, %p461
    %p463 = scmp.le.s32.totalorder 1, %s25
    %p464 = scmp.lt.s32.totalorder %s25, 3
    %p465 = pnand %p463, %p464
    %p466 = pneg %p465
    // Predicated region
    $region9: #{convtasnet_forward.1} parent=5 // pred_check
      _
    $region10: #{convtasnet_forward.1} parent=5 // pred_check_branch
      %468 = sbr.rel (%p465) target = $region12
    $region11: #{convtasnet_forward.1} parent=5 // pred_region
      %s469 = ssub.s32 %s25, 1
      // Predicated region
      $region13: #{convtasnet_forward.1} parent=11 // pred_check
        %p470 = pneg %p72
      $region14: #{convtasnet_forward.1} parent=11 // pred_check_branch
        %472 = sbr.rel (%p470) target = $region16
      $region15: #{convtasnet_forward.1} parent=11 // pred_region
        _
      $region16: #{convtasnet_forward.1} parent=11 // pred_fallthru
        _
      // Predicated region
      $region17: #{convtasnet_forward.1} parent=11 // pred_check
        %p473 = pneg %p93
      $region18: #{convtasnet_forward.1} parent=11 // pred_check_branch
        %475 = sbr.rel (%p473) target = $region20
      $region19: #{convtasnet_forward.1} parent=11 // pred_region
        _
      $region20: #{convtasnet_forward.1} parent=11 // pred_fallthru
        _
      // Predicated region
      $region21: #{convtasnet_forward.1} parent=11 // pred_check
        %p476 = pneg %p114
      $region22: #{convtasnet_forward.1} parent=11 // pred_check_branch
        %478 = sbr.rel (%p476) target = $region24
      $region23: #{convtasnet_forward.1} parent=11 // pred_region
        _
      $region24: #{convtasnet_forward.1} parent=11 // pred_fallthru
        _
      // Predicated region
      $region25: #{convtasnet_forward.1} parent=11 // pred_check
        %p479 = pneg %p135
      $region26: #{convtasnet_forward.1} parent=11 // pred_check_branch
        %481 = sbr.rel (%p479) target = $region28
      $region27: #{convtasnet_forward.1} parent=11 // pred_region
        _
      $region28: #{convtasnet_forward.1} parent=11 // pred_fallthru
        _
      // Predicated region
      $region29: #{convtasnet_forward.1} parent=11 // pred_check
        %p482 = pneg %p156
      $region30: #{convtasnet_forward.1} parent=11 // pred_check_branch
        %484 = sbr.rel (%p482) target = $region32
      $region31: #{convtasnet_forward.1} parent=11 // pred_region
        _
      $region32: #{convtasnet_forward.1} parent=11 // pred_fallthru
        _
      // Predicated region
      $region33: #{convtasnet_forward.1} parent=11 // pred_check
        %p485 = pneg %p177
      $region34: #{convtasnet_forward.1} parent=11 // pred_check_branch
        %487 = sbr.rel (%p485) target = $region36
      $region35: #{convtasnet_forward.1} parent=11 // pred_region
        _
      $region36: #{convtasnet_forward.1} parent=11 // pred_fallthru
        _
      // Predicated region
      $region37: #{convtasnet_forward.1} parent=11 // pred_check
        %p488 = pneg %p198
      $region38: #{convtasnet_forward.1} parent=11 // pred_check_branch
        %490 = sbr.rel (%p488) target = $region40
      $region39: #{convtasnet_forward.1} parent=11 // pred_region
        _
      $region40: #{convtasnet_forward.1} parent=11 // pred_fallthru
        _
      // Predicated region
      $region41: #{convtasnet_forward.1} parent=11 // pred_check
        %p491 = pneg %p219
      $region42: #{convtasnet_forward.1} parent=11 // pred_check_branch
        %493 = sbr.rel (%p491) target = $region44
      $region43: #{convtasnet_forward.1} parent=11 // pred_region
        _
      $region44: #{convtasnet_forward.1} parent=11 // pred_fallthru
        _
      // Predicated region
      $region45: #{convtasnet_forward.1} parent=11 // pred_check
        %p494 = pneg %p240
      $region46: #{convtasnet_forward.1} parent=11 // pred_check_branch
        %496 = sbr.rel (%p494) target = $region48
      $region47: #{convtasnet_forward.1} parent=11 // pred_region
        _
      $region48: #{convtasnet_forward.1} parent=11 // pred_fallthru
        _
      // Predicated region
      $region49: #{convtasnet_forward.1} parent=11 // pred_check
        %p497 = pneg %p261
      $region50: #{convtasnet_forward.1} parent=11 // pred_check_branch
        %499 = sbr.rel (%p497) target = $region52
      $region51: #{convtasnet_forward.1} parent=11 // pred_region
        _
      $region52: #{convtasnet_forward.1} parent=11 // pred_fallthru
        _
      // Predicated region
      $region53: #{convtasnet_forward.1} parent=11 // pred_check
        %p500 = pneg %p282
      $region54: #{convtasnet_forward.1} parent=11 // pred_check_branch
        %502 = sbr.rel (%p500) target = $region56
      $region55: #{convtasnet_forward.1} parent=11 // pred_region
        _
      $region56: #{convtasnet_forward.1} parent=11 // pred_fallthru
        _
      // Predicated region
      $region57: #{convtasnet_forward.1} parent=11 // pred_check
        %p503 = pneg %p303
      $region58: #{convtasnet_forward.1} parent=11 // pred_check_branch
        %505 = sbr.rel (%p503) target = $region60
      $region59: #{convtasnet_forward.1} parent=11 // pred_region
        _
      $region60: #{convtasnet_forward.1} parent=11 // pred_fallthru
        _
      // Predicated region
      $region61: #{convtasnet_forward.1} parent=11 // pred_check
        %p506 = pneg %p324
      $region62: #{convtasnet_forward.1} parent=11 // pred_check_branch
        %508 = sbr.rel (%p506) target = $region64
      $region63: #{convtasnet_forward.1} parent=11 // pred_region
        _
      $region64: #{convtasnet_forward.1} parent=11 // pred_fallthru
        _
      // Predicated region
      $region65: #{convtasnet_forward.1} parent=11 // pred_check
        %p509 = pneg %p345
      $region66: #{convtasnet_forward.1} parent=11 // pred_check_branch
        %511 = sbr.rel (%p509) target = $region68
      $region67: #{convtasnet_forward.1} parent=11 // pred_region
        _
      $region68: #{convtasnet_forward.1} parent=11 // pred_fallthru
        _
      // Predicated region
      $region69: #{convtasnet_forward.1} parent=11 // pred_check
        %p512 = pneg %p366
      $region70: #{convtasnet_forward.1} parent=11 // pred_check_branch
        %514 = sbr.rel (%p512) target = $region72
      $region71: #{convtasnet_forward.1} parent=11 // pred_region
        _
      $region72: #{convtasnet_forward.1} parent=11 // pred_fallthru
        _
      // Predicated region
      $region73: #{convtasnet_forward.1} parent=11 // pred_check
        %p515 = pneg %p387
      $region74: #{convtasnet_forward.1} parent=11 // pred_check_branch
        %517 = sbr.rel (%p515) target = $region76
      $region75: #{convtasnet_forward.1} parent=11 // pred_region
        _
      $region76: #{convtasnet_forward.1} parent=11 // pred_fallthru
        _
      // Predicated region
      $region77: #{convtasnet_forward.1} parent=11 // pred_check
        %p518 = pneg %p408
      $region78: #{convtasnet_forward.1} parent=11 // pred_check_branch
        %520 = sbr.rel (%p518) target = $region80
      $region79: #{convtasnet_forward.1} parent=11 // pred_region
        _
      $region80: #{convtasnet_forward.1} parent=11 // pred_fallthru
        _
      // Predicated region
      $region81: #{convtasnet_forward.1} parent=11 // pred_check
        %p521 = pneg %p429
      $region82: #{convtasnet_forward.1} parent=11 // pred_check_branch
        %523 = sbr.rel (%p521) target = $region84
      $region83: #{convtasnet_forward.1} parent=11 // pred_region
        _
      $region84: #{convtasnet_forward.1} parent=11 // pred_fallthru
        _
    $region12: #{convtasnet_forward.1} parent=5 // pred_fallthru
      _
    %p524 = scmp.lt.s32.totalorder %s25, 2
    // Predicated region
    $region85: #{convtasnet_forward.1} parent=5 // pred_check
      %p525 = pneg %p524
    $region86: #{convtasnet_forward.1} parent=5 // pred_check_branch
      %527 = sbr.rel (%p525) target = $region88
    $region87: #{convtasnet_forward.1} parent=5 // pred_region
      // Predicated region
      $region89: #{convtasnet_forward.1} parent=87 // pred_check
        %p528 = pneg %p45
      $region90: #{convtasnet_forward.1} parent=87 // pred_check_branch
        %530 = sbr.rel (%p528) target = $region92
      $region91: #{convtasnet_forward.1} parent=87 // pred_region
        %p531 = scmp.lt.s32.totalorder %s25, 1
        %s532 = scalar_select %p531, %s25, 1
        %s533 = smul.addr %s532, 2
        %s534 = smul.addr %s533, 4
        %s535 = scalar_lea.vmem %s0, %s534
      $region92: #{convtasnet_forward.1} parent=87 // pred_fallthru
        _
    $region88: #{convtasnet_forward.1} parent=5 // pred_fallthru
      _
    %p536 = scmp.le.s32.totalorder 1, %s25
    %p537 = scmp.lt.s32.totalorder %s25, 3
    %p538 = pnand %p536, %p537
    %p539 = pneg %p538
    // Predicated region
    $region93: #{convtasnet_forward.1} parent=5 // pred_check
      _
    $region94: #{convtasnet_forward.1} parent=5 // pred_check_branch
      %541 = sbr.rel (%p538) target = $region96
    $region95: #{convtasnet_forward.1} parent=5 // pred_region
      %s542 = ssub.s32 %s25, 1
      %p543 = scmp.lt.s32.totalorder %s30, 1
      %s544 = scalar_select %p543, %s30, 1
      %s545 = smul.addr %s544, 2
      %s546 = smul.addr %s545, 4
      %s547 = scalar_lea.vmem %s0, %s546
      %p548 = pneg %p51
      %p549 = pneg %p48
      %p550 = pneg %p72
      %p551 = pneg %p69
      %p552 = pneg %p93
      %p553 = pneg %p90
      %p554 = pneg %p114
      %p555 = pneg %p111
      %p556 = pneg %p135
      %p557 = pneg %p132
      %p558 = pneg %p156
      %p559 = pneg %p153
      %p560 = pneg %p177
      %p561 = pneg %p174
      %p562 = pneg %p198
      %p563 = pneg %p195
      %p564 = pneg %p219
      %p565 = pneg %p216
      %p566 = pneg %p240
      %p567 = pneg %p237
      %p568 = pneg %p261
      %p569 = pneg %p258
      %p570 = pneg %p282
      %p571 = pneg %p279
      %p572 = pneg %p303
      %p573 = pneg %p300
      %p574 = pneg %p324
      %p575 = pneg %p321
      %p576 = pneg %p345
      %p577 = pneg %p342
      %p578 = pneg %p366
      %p579 = pneg %p363
      %p580 = pneg %p387
      %p581 = pneg %p384
      %p582 = pneg %p408
      %p583 = pneg %p405
      %p584 = pneg %p429
      %p585 = pneg %p426
      %p586 = pneg %p455
      %p587 = pneg %p452
      %p588 = scmp.lt.s32.totalorder %s30, 1
      %s589 = scalar_select %p588, %s30, 1
      %s590 = smul.addr %s589, 4
      %s591 = smul.addr %s590, 8
      %s592 = scalar_lea.vmem %s19, %s591
      %p593 = scmp.lt.s32.totalorder %s30, 1
      %s594 = scalar_select %p593, %s30, 1
      %s595 = smul.addr %s594, 2
      %s596 = smul.addr %s595, 4
      %s597 = scalar_lea.vmem %s0, %s596
      %p598 = scmp.lt.s32.totalorder %s30, 1
      %s599 = scalar_select %p598, %s30, 1
      %s600 = smul.addr %s599, 4
      %s601 = smul.addr %s600, 8
      %s602 = scalar_lea.vmem %s19, %s601
      %v604 = vld [vmem:[%s597] sm:$0xff]
      %v606 = vunpack.c.l.b16 %v604
      %v607 = vunpack.c.h.b16 %v604
      %v608 = vpack.c.b16 %v606, %v606
      %v609 = vpack.c.b16 %v607, %v607
      %610 = vrot.lane.b32.xlu0 %v608, 127
      %v611 = vpop.permute.xlu0 %610
      %612 = vrot.lane.b32.xlu0 %v609, 127
      %v613 = vpop.permute.xlu0 %612
      %vm614 = vcmask 1039360
      %v615 = vsel %vm614, %v611, %v613
      %vm616 = vcmask 1043456
      %v619 = vsel %vm616, %v604, %v615
      %v621 = vld [vmem:[%s1] sm:$0xf]
      %v622 = vld [vmem:[%s1 + $0x4] sm:$0xf]
      %v623 = vld [vmem:[%s2] sm:$0xff]
      %v624 = vld [vmem:[%s2 + $0x8] sm:$0xff]
      %626 = vset.pattern.permute.xlu0 0
      %627 = vperm.xlu0 %626, %v623
      %v628 = vpop.permute.xlu0 %627
      %631 = vset.pattern.permute.xlu0 0
      %632 = vperm.xlu0 %631, %v624
      %v633 = vpop.permute.xlu0 %632
      %v637 = vunpack.c.l.b16 %v621
      %v638 = vunpack.c.l.b16 %v622
      %v639 = vpack.c.b16 %v638, %v637
      %vm640 = vcmask 130048
      %v642 = vsel %vm640, %v639, 0
      %644 = vmatpush.bf16.msra.mxu0 0
      %645 = vmatpush.bf16.msra.mxu0 0
      %646 = vmatpush.bf16.msra.mxu0 0
      %647 = vmatpush.bf16.msra.mxu0 0
      %648 = vmatpush.bf16.msra.mxu0 0
      %649 = vmatpush.bf16.msra.mxu0 0
      %650 = vmatpush.bf16.msra.mxu0 0
      %651 = vmatpush.bf16.msra.mxu0 %v619
      %652 = vmatmul.bf16.gmra.mxu0 %v642
      %v653 = vpop.f32.mrf.mxu0
      %v654 = vadd.f32 %v628, %v653
      %v655 = vpop.f32.mrf.mxu0
      %v656 = vadd.f32 %v633, %v655
      %657 = vdwg.mxu0
      %v658 = vlaneseq
      %v659 = vand.u32 %v658, 127
      %vm660 = vcmp.ge.s32.totalorder %v659, 1
      %vm661 = vcmp.lt.s32.totalorder %v659, 127
      %v662 = vld [vmem:[%s3] sm:$0xf]
      %v663 = vld [vmem:[%s3 + $0x4] sm:$0xf]
      %v664 = vld [vmem:[%s4] sm:$0xff]
      %v665 = vld [vmem:[%s4 + $0x8] sm:$0xff]
      %v666 = vld [vmem:[%s5] sm:$0xff]
      %v667 = vld [vmem:[%s5 + $0x8] sm:$0xff]
      %668 = vrot.lane.b32.xlu0 %v654, 1
      %v669 = vpop.permute.xlu0 %668
      %670 = vrot.lane.b32.xlu0 %v656, 1
      %v671 = vpop.permute.xlu0 %670
      %v672 = vsel %vm660, %v669, 0.0
      %v673 = vsel %vm660, %v671, 0.0
      %674 = vrot.lane.b32.xlu0 %v654, 127
      %v675 = vpop.permute.xlu0 %674
      %676 = vrot.lane.b32.xlu0 %v656, 127
      %v677 = vpop.permute.xlu0 %676
      %v678 = vsel %vm661, %v675, 0.0
      %v679 = vsel %vm661, %v677, 0.0
      %v680 = vpack.c.bf16 %v673, %v672
      %v681 = vpack.c.bf16 %v656, %v654
      %v682 = vpack.c.bf16 %v679, %v678
      %684 = vset.pattern.permute.xlu0 0
      %685 = vperm.xlu0 %684, %v664
      %v686 = vpop.permute.xlu0 %685
      %689 = vset.pattern.permute.xlu0 0
      %690 = vperm.xlu0 %689, %v665
      %v691 = vpop.permute.xlu0 %690
      %v695 = vunpack.c.l.b16 %v662
      %v696 = vunpack.c.l.b16 %v663
      %v697 = vpack.c.b16 %v696, %v695
      %vm698 = vcmask 392192
      %v700 = vsel %vm698, %v697, 0
      %702 = vmatpush.bf16.msra.mxu0 0
      %703 = vmatpush.bf16.msra.mxu0 0
      %704 = vmatpush.bf16.msra.mxu0 0
      %705 = vmatpush.bf16.msra.mxu0 0
      %706 = vmatpush.bf16.msra.mxu0 0
      %707 = vmatpush.bf16.msra.mxu0 %v682
      %708 = vmatpush.bf16.msra.mxu0 %v681
      %709 = vmatpush.bf16.msra.mxu0 %v680
      %710 = vmatmul.bf16.gmra.mxu0 %v700
      %v711 = vpop.f32.mrf.mxu0
      %v712 = vadd.f32 %v686, %v711
      %v713 = vpop.f32.mrf.mxu0
      %v714 = vadd.f32 %v691, %v713
      %715 = vdwg.mxu0
      %vm716 = vcmp.gt.f32.partialorder %v712, 0.0
      %vm717 = vcmp.gt.f32.partialorder %v714, 0.0
      %719 = vset.pattern.permute.xlu0 0
      %720 = vperm.xlu0 %719, %v666
      %v721 = vpop.permute.xlu0 %720
      %724 = vset.pattern.permute.xlu0 0
      %725 = vperm.xlu0 %724, %v667
      %v726 = vpop.permute.xlu0 %725
      %v728 = vmul.f32 %v721, %v712
      %v729 = vmul.f32 %v726, %v714
      %v730 = vsel %vm716, %v712, %v728
      %v731 = vsel %vm717, %v714, %v729
      %v732 = vld [vmem:[%s6] sm:$0xf]
      %v733 = vld [vmem:[%s6 + $0x4] sm:$0xf]
      %v734 = vld [vmem:[%s7] sm:$0xff]
      %v735 = vld [vmem:[%s7 + $0x8] sm:$0xff]
      %v736 = vld [vmem:[%s8] sm:$0xff]
      %v737 = vld [vmem:[%s8 + $0x8] sm:$0xff]
      %738 = vrot.lane.b32.xlu0 %v730, 1
      %v739 = vpop.permute.xlu0 %738
      %740 = vrot.lane.b32.xlu0 %v731, 1
      %v741 = vpop.permute.xlu0 %740
      %v742 = vsel %vm660, %v739, 0.0
      %v743 = vsel %vm660, %v741, 0.0
      %744 = vrot.lane.b32.xlu0 %v730, 127
      %v745 = vpop.permute.xlu0 %744
      %746 = vrot.lane.b32.xlu0 %v731, 127
      %v747 = vpop.permute.xlu0 %746
      %v748 = vsel %vm661, %v745, 0.0
      %v749 = vsel %vm661, %v747, 0.0
      %v750 = vpack.c.bf16 %v743, %v742
      %v751 = vpack.c.bf16 %v731, %v730
      %v752 = vpack.c.bf16 %v749, %v748
      %754 = vset.pattern.permute.xlu0 0
      %755 = vperm.xlu0 %754, %v734
      %v756 = vpop.permute.xlu0 %755
      %759 = vset.pattern.permute.xlu0 0
      %760 = vperm.xlu0 %759, %v735
      %v761 = vpop.permute.xlu0 %760
      %v765 = vunpack.c.l.b16 %v732
      %v766 = vunpack.c.l.b16 %v733
      %v767 = vpack.c.b16 %v766, %v765
      %v769 = vsel %vm698, %v767, 0
      %771 = vmatpush.bf16.msra.mxu0 0
      %772 = vmatpush.bf16.msra.mxu0 0
      %773 = vmatpush.bf16.msra.mxu0 0
      %774 = vmatpush.bf16.msra.mxu0 0
      %775 = vmatpush.bf16.msra.mxu0 0
      %776 = vmatpush.bf16.msra.mxu0 %v752
      %777 = vmatpush.bf16.msra.mxu0 %v751
      %778 = vmatpush.bf16.msra.mxu0 %v750
      %779 = vmatmul.bf16.gmra.mxu0 %v769
      %v780 = vpop.f32.mrf.mxu0
      %v781 = vadd.f32 %v756, %v780
      %v782 = vpop.f32.mrf.mxu0
      %v783 = vadd.f32 %v761, %v782
      %784 = vdwg.mxu0
      %vm785 = vcmp.gt.f32.partialorder %v781, 0.0
      %vm786 = vcmp.gt.f32.partialorder %v783, 0.0
      %788 = vset.pattern.permute.xlu0 0
      %789 = vperm.xlu0 %788, %v736
      %v790 = vpop.permute.xlu0 %789
      %793 = vset.pattern.permute.xlu0 0
      %794 = vperm.xlu0 %793, %v737
      %v795 = vpop.permute.xlu0 %794
      %v797 = vmul.f32 %v790, %v781
      %v798 = vmul.f32 %v795, %v783
      %v799 = vsel %vm785, %v781, %v797
      %v800 = vsel %vm786, %v783, %v798
      %v801 = vpack.c.bf16 %v800, %v799
      %v802 = vld [vmem:[%s9] sm:$0xf]
      %v803 = vld [vmem:[%s9 + $0x4] sm:$0xf]
      %v804 = vld [vmem:[%s9 + $0x8] sm:$0xf]
      %v805 = vld [vmem:[%s9 + $0xc] sm:$0xf]
      %v806 = vld [vmem:[%s10] sm:$0xff]
      %v807 = vld [vmem:[%s10 + $0x8] sm:$0xff]
      %v808 = vld [vmem:[%s10 + $0x10] sm:$0xff]
      %v809 = vld [vmem:[%s10 + $0x18] sm:$0xff]
      %811 = vset.pattern.permute.xlu0 0
      %812 = vperm.xlu0 %811, %v806
      %v813 = vpop.permute.xlu0 %812
      %816 = vset.pattern.permute.xlu0 0
      %817 = vperm.xlu0 %816, %v807
      %v818 = vpop.permute.xlu0 %817
      %821 = vset.pattern.permute.xlu0 0
      %822 = vperm.xlu0 %821, %v808
      %v823 = vpop.permute.xlu0 %822
      %826 = vset.pattern.permute.xlu0 0
      %827 = vperm.xlu0 %826, %v809
      %v828 = vpop.permute.xlu0 %827
      %v834 = vunpack.c.l.b16 %v802
      %v835 = vunpack.c.l.b16 %v803
      %v836 = vunpack.c.l.b16 %v804
      %v837 = vunpack.c.l.b16 %v805
      %v838 = vpack.c.b16 %v835, %v834
      %v839 = vpack.c.b16 %v837, %v836
      %v841 = vsel %vm640, %v838, 0
      %v844 = vsel %vm640, %v839, 0
      %846 = vmatpush.bf16.msra.mxu0 0
      %847 = vmatpush.bf16.msra.mxu0 0
      %848 = vmatpush.bf16.msra.mxu0 0
      %849 = vmatpush.bf16.msra.mxu0 0
      %850 = vmatpush.bf16.msra.mxu0 0
      %851 = vmatpush.bf16.msra.mxu0 0
      %852 = vmatpush.bf16.msra.mxu0 0
      %853 = vmatpush.bf16.msra.mxu0 %v801
      %854 = vmatmul.bf16.gmra.mxu0 %v841
      %v855 = vpop.f32.mrf.mxu0
      %v856 = vadd.f32 %v813, %v855
      %v857 = vpop.f32.mrf.mxu0
      %v858 = vadd.f32 %v818, %v857
      %859 = vmatmul.bf16.gmra.mxu0 %v844
      %v860 = vpop.f32.mrf.mxu0
      %v861 = vadd.f32 %v823, %v860
      %v862 = vpop.f32.mrf.mxu0
      %v863 = vadd.f32 %v828, %v862
      %864 = vdwg.mxu0
      %v865 = vmax.f32 %v856, 0.0
      %v866 = vmax.f32 %v858, 0.0
      %v867 = vmax.f32 %v861, 0.0
      %v868 = vmax.f32 %v863, 0.0
      %v869 = vld [vmem:[%s11] sm:$0xf]
      %v870 = vld [vmem:[%s11 + $0x4] sm:$0xf]
      %v871 = vld [vmem:[%s12] sm:$0xff]
      %v872 = vld [vmem:[%s12 + $0x8] sm:$0xff]
      %v873 = vld [vmem:[%s13] sm:$0xff]
      %v874 = vld [vmem:[%s13 + $0x8] sm:$0xff]
      %v875 = vld [vmem:[%s14] sm:$0xf]
      %v876 = vld [vmem:[%s14 + $0x4] sm:$0xf]
      %v877 = vld [vmem:[%s15] sm:$0xff]
      %v878 = vld [vmem:[%s15 + $0x8] sm:$0xff]
      %v879 = vld [vmem:[%s16] sm:$0xff]
      %v880 = vld [vmem:[%s16 + $0x8] sm:$0xff]
      %v881 = vld [vmem:[%s17] sm:$0xf]
      %v882 = vld [vmem:[%s18] sm:$0xf]
      %v883 = vmul.f32 %v865, %v799
      %v884 = vmul.f32 %v866, %v800
      %885 = vrot.lane.b32.xlu0 %v883, 1
      %v886 = vpop.permute.xlu0 %885
      %887 = vrot.lane.b32.xlu0 %v884, 1
      %v888 = vpop.permute.xlu0 %887
      %v889 = vsel %vm660, %v886, 0.0
      %v890 = vsel %vm660, %v888, 0.0
      %891 = vrot.lane.b32.xlu0 %v883, 127
      %v892 = vpop.permute.xlu0 %891
      %893 = vrot.lane.b32.xlu0 %v884, 127
      %v894 = vpop.permute.xlu0 %893
      %v895 = vsel %vm661, %v892, 0.0
      %v896 = vsel %vm661, %v894, 0.0
      %v897 = vpack.c.bf16 %v890, %v889
      %v898 = vpack.c.bf16 %v884, %v883
      %v899 = vpack.c.bf16 %v896, %v895
      %901 = vset.pattern.permute.xlu0 0
      %902 = vperm.xlu0 %901, %v871
      %v903 = vpop.permute.xlu0 %902
      %906 = vset.pattern.permute.xlu0 0
      %907 = vperm.xlu0 %906, %v872
      %v908 = vpop.permute.xlu0 %907
      %v912 = vunpack.c.l.b16 %v869
      %v913 = vunpack.c.l.b16 %v870
      %v914 = vpack.c.b16 %v913, %v912
      %v916 = vsel %vm698, %v914, 0
      %918 = vmatpush.bf16.msra.mxu0 0
      %919 = vmatpush.bf16.msra.mxu0 0
      %920 = vmatpush.bf16.msra.mxu0 0
      %921 = vmatpush.bf16.msra.mxu0 0
      %922 = vmatpush.bf16.msra.mxu0 0
      %923 = vmatpush.bf16.msra.mxu0 %v899
      %924 = vmatpush.bf16.msra.mxu0 %v898
      %925 = vmatpush.bf16.msra.mxu0 %v897
      %926 = vmatmul.bf16.gmra.mxu0 %v916
      %v927 = vpop.f32.mrf.mxu0
      %v928 = vadd.f32 %v903, %v927
      %v929 = vpop.f32.mrf.mxu0
      %v930 = vadd.f32 %v908, %v929
      %931 = vdwg.mxu0
      %vm932 = vcmp.gt.f32.partialorder %v928, 0.0
      %vm933 = vcmp.gt.f32.partialorder %v930, 0.0
      %935 = vset.pattern.permute.xlu0 0
      %936 = vperm.xlu0 %935, %v873
      %v937 = vpop.permute.xlu0 %936
      %940 = vset.pattern.permute.xlu0 0
      %941 = vperm.xlu0 %940, %v874
      %v942 = vpop.permute.xlu0 %941
      %v944 = vmul.f32 %v937, %v928
      %v945 = vmul.f32 %v942, %v930
      %v946 = vsel %vm932, %v928, %v944
      %v947 = vsel %vm933, %v930, %v945
      %948 = vrot.lane.b32.xlu0 %v946, 1
      %v949 = vpop.permute.xlu0 %948
      %950 = vrot.lane.b32.xlu0 %v947, 1
      %v951 = vpop.permute.xlu0 %950
      %v952 = vsel %vm660, %v949, 0.0
      %v953 = vsel %vm660, %v951, 0.0
      %954 = vrot.lane.b32.xlu0 %v946, 127
      %v955 = vpop.permute.xlu0 %954
      %956 = vrot.lane.b32.xlu0 %v947, 127
      %v957 = vpop.permute.xlu0 %956
      %v958 = vsel %vm661, %v955, 0.0
      %v959 = vsel %vm661, %v957, 0.0
      %v960 = vpack.c.bf16 %v953, %v952
      %v961 = vpack.c.bf16 %v947, %v946
      %v962 = vpack.c.bf16 %v959, %v958
      %964 = vset.pattern.permute.xlu0 0
      %965 = vperm.xlu0 %964, %v877
      %v966 = vpop.permute.xlu0 %965
      %969 = vset.pattern.permute.xlu0 0
      %970 = vperm.xlu0 %969, %v878
      %v971 = vpop.permute.xlu0 %970
      %v975 = vunpack.c.l.b16 %v875
      %v976 = vunpack.c.l.b16 %v876
      %v977 = vpack.c.b16 %v976, %v975
      %v979 = vsel %vm698, %v977, 0
      %981 = vmatpush.bf16.msra.mxu0 0
      %982 = vmatpush.bf16.msra.mxu0 0
      %983 = vmatpush.bf16.msra.mxu0 0
      %984 = vmatpush.bf16.msra.mxu0 0
      %985 = vmatpush.bf16.msra.mxu0 0
      %986 = vmatpush.bf16.msra.mxu0 %v962
      %987 = vmatpush.bf16.msra.mxu0 %v961
      %988 = vmatpush.bf16.msra.mxu0 %v960
      %989 = vmatmul.bf16.gmra.mxu0 %v979
      %v990 = vpop.f32.mrf.mxu0
      %v991 = vadd.f32 %v966, %v990
      %v992 = vpop.f32.mrf.mxu0
      %v993 = vadd.f32 %v971, %v992
      %994 = vdwg.mxu0
      %vm995 = vcmp.gt.f32.partialorder %v991, 0.0
      %vm996 = vcmp.gt.f32.partialorder %v993, 0.0
      %998 = vset.pattern.permute.xlu0 0
      %999 = vperm.xlu0 %998, %v879
      %v1000 = vpop.permute.xlu0 %999
      %1003 = vset.pattern.permute.xlu0 0
      %1004 = vperm.xlu0 %1003, %v880
      %v1005 = vpop.permute.xlu0 %1004
      %v1007 = vmul.f32 %v1000, %v991
      %v1008 = vmul.f32 %v1005, %v993
      %v1009 = vsel %vm995, %v991, %v1007
      %v1010 = vsel %vm996, %v993, %v1008
      %v1011 = vpack.c.bf16 %v1010, %v1009
      %v1013 = vsel %vm640, %v881, 0
      %1015 = vmatpush.bf16.msra.mxu0 0
      %1016 = vmatpush.bf16.msra.mxu0 0
      %1017 = vmatpush.bf16.msra.mxu0 0
      %1018 = vmatpush.bf16.msra.mxu0 0
      %1019 = vmatpush.bf16.msra.mxu0 0
      %1020 = vmatpush.bf16.msra.mxu0 0
      %1021 = vmatpush.bf16.msra.mxu0 0
      %1022 = vmatpush.bf16.msra.mxu0 %v1011
      %1023 = vmatmul.bf16.gmra.mxu0 %v1013
      %v1024 = vpop.f32.mrf.mxu0
      %v1025 = vadd.f32 0.0, %v1024
      %v1026 = vpop.f32.mrf.mxu0
      %1027 = vdwg.mxu0
      %v1029 = vsel %vm640, %v882, 0
      %1031 = vmatpush.bf16.msra.mxu0 0
      %1032 = vmatpush.bf16.msra.mxu0 0
      %1033 = vmatpush.bf16.msra.mxu0 0
      %1034 = vmatpush.bf16.msra.mxu0 0
      %1035 = vmatpush.bf16.msra.mxu0 0
      %1036 = vmatpush.bf16.msra.mxu0 0
      %1037 = vmatpush.bf16.msra.mxu0 0
      %1038 = vmatpush.bf16.msra.mxu0 %v1011
      %1039 = vmatmul.bf16.gmra.mxu0 %v1029
      %v1040 = vpop.f32.mrf.mxu0
      %v1041 = vadd.f32 0.0, %v1040
      %v1042 = vpop.f32.mrf.mxu0
      %1043 = vdwg.mxu0
      %1045 = vrot.lane.b32.xlu0 %v1041, 1
      %v1046 = vpop.permute.xlu0 %1045
      %vm1048 = vcmask 7168
      %v1049 = vsel %vm1048, 0.0, %v1046
      %v1050 = vadd.f32 %v1025, %v1049
      %v1051 = vadd.f32 %v1046, 0.0
      %1052 = vst [vmem:[%s602] sm:$0xff] %v1050
      %1053 = vst.msk [vmem:[%s602 + $0x8] sm:$0xff] %vm1048, %v1051
      %v1054 = vmul.f32 %v867, %v799
      %v1055 = vmul.f32 %v868, %v800
      %1056 = vrot.lane.b32.xlu0 %v1054, 1
      %v1057 = vpop.permute.xlu0 %1056
      %1058 = vrot.lane.b32.xlu0 %v1055, 1
      %v1059 = vpop.permute.xlu0 %1058
      %v1060 = vsel %vm660, %v1057, 0.0
      %v1061 = vsel %vm660, %v1059, 0.0
      %1062 = vrot.lane.b32.xlu0 %v1054, 127
      %v1063 = vpop.permute.xlu0 %1062
      %1064 = vrot.lane.b32.xlu0 %v1055, 127
      %v1065 = vpop.permute.xlu0 %1064
      %v1066 = vsel %vm661, %v1063, 0.0
      %v1067 = vsel %vm661, %v1065, 0.0
      %v1068 = vpack.c.bf16 %v1061, %v1060
      %v1069 = vpack.c.bf16 %v1055, %v1054
      %v1070 = vpack.c.bf16 %v1067, %v1066
      %1071 = vmatpush.bf16.msra.mxu0 0
      %1072 = vmatpush.bf16.msra.mxu0 0
      %1073 = vmatpush.bf16.msra.mxu0 0
      %1074 = vmatpush.bf16.msra.mxu0 0
      %1075 = vmatpush.bf16.msra.mxu0 0
      %1076 = vmatpush.bf16.msra.mxu0 %v1070
      %1077 = vmatpush.bf16.msra.mxu0 %v1069
      %1078 = vmatpush.bf16.msra.mxu0 %v1068
      %1079 = vmatmul.bf16.gmra.mxu0 %v916
      %v1080 = vpop.f32.mrf.mxu0
      %v1081 = vadd.f32 %v903, %v1080
      %v1082 = vpop.f32.mrf.mxu0
      %v1083 = vadd.f32 %v908, %v1082
      %1084 = vdwg.mxu0
      %vm1085 = vcmp.gt.f32.partialorder %v1081, 0.0
      %vm1086 = vcmp.gt.f32.partialorder %v1083, 0.0
      %v1087 = vmul.f32 %v937, %v1081
      %v1088 = vmul.f32 %v942, %v1083
      %v1089 = vsel %vm1085, %v1081, %v1087
      %v1090 = vsel %vm1086, %v1083, %v1088
      %1091 = vrot.lane.b32.xlu0 %v1089, 1
      %v1092 = vpop.permute.xlu0 %1091
      %1093 = vrot.lane.b32.xlu0 %v1090, 1
      %v1094 = vpop.permute.xlu0 %1093
      %v1095 = vsel %vm660, %v1092, 0.0
      %v1096 = vsel %vm660, %v1094, 0.0
      %1097 = vrot.lane.b32.xlu0 %v1089, 127
      %v1098 = vpop.permute.xlu0 %1097
      %1099 = vrot.lane.b32.xlu0 %v1090, 127
      %v1100 = vpop.permute.xlu0 %1099
      %v1101 = vsel %vm661, %v1098, 0.0
      %v1102 = vsel %vm661, %v1100, 0.0
      %v1103 = vpack.c.bf16 %v1096, %v1095
      %v1104 = vpack.c.bf16 %v1090, %v1089
      %v1105 = vpack.c.bf16 %v1102, %v1101
      %1106 = vmatpush.bf16.msra.mxu0 0
      %1107 = vmatpush.bf16.msra.mxu0 0
      %1108 = vmatpush.bf16.msra.mxu0 0
      %1109 = vmatpush.bf16.msra.mxu0 0
      %1110 = vmatpush.bf16.msra.mxu0 0
      %1111 = vmatpush.bf16.msra.mxu0 %v1105
      %1112 = vmatpush.bf16.msra.mxu0 %v1104
      %1113 = vmatpush.bf16.msra.mxu0 %v1103
      %1114 = vmatmul.bf16.gmra.mxu0 %v979
      %v1115 = vpop.f32.mrf.mxu0
      %v1116 = vadd.f32 %v966, %v1115
      %v1117 = vpop.f32.mrf.mxu0
      %v1118 = vadd.f32 %v971, %v1117
      %1119 = vdwg.mxu0
      %vm1120 = vcmp.gt.f32.partialorder %v1116, 0.0
      %vm1121 = vcmp.gt.f32.partialorder %v1118, 0.0
      %v1122 = vmul.f32 %v1000, %v1116
      %v1123 = vmul.f32 %v1005, %v1118
      %v1124 = vsel %vm1120, %v1116, %v1122
      %v1125 = vsel %vm1121, %v1118, %v1123
      %v1126 = vpack.c.bf16 %v1125, %v1124
      %1127 = vmatpush.bf16.msra.mxu0 0
      %1128 = vmatpush.bf16.msra.mxu0 0
      %1129 = vmatpush.bf16.msra.mxu0 0
      %1130 = vmatpush.bf16.msra.mxu0 0
      %1131 = vmatpush.bf16.msra.mxu0 0
      %1132 = vmatpush.bf16.msra.mxu0 0
      %1133 = vmatpush.bf16.msra.mxu0 0
      %1134 = vmatpush.bf16.msra.mxu0 %v1126
      %1135 = vmatmul.bf16.gmra.mxu0 %v1013
      %v1136 = vpop.f32.mrf.mxu0
      %v1137 = vadd.f32 0.0, %v1136
      %v1138 = vpop.f32.mrf.mxu0
      %1139 = vdwg.mxu0
      %1140 = vmatpush.bf16.msra.mxu0 0
      %1141 = vmatpush.bf16.msra.mxu0 0
      %1142 = vmatpush.bf16.msra.mxu0 0
      %1143 = vmatpush.bf16.msra.mxu0 0
      %1144 = vmatpush.bf16.msra.mxu0 0
      %1145 = vmatpush.bf16.msra.mxu0 0
      %1146 = vmatpush.bf16.msra.mxu0 0
      %1147 = vmatpush.bf16.msra.mxu0 %v1126
      %1148 = vmatmul.bf16.gmra.mxu0 %v1029
      %v1149 = vpop.f32.mrf.mxu0
      %v1150 = vadd.f32 0.0, %v1149
      %v1151 = vpop.f32.mrf.mxu0
      %1152 = vdwg.mxu0
      %1154 = vrot.lane.b32.xlu0 %v1150, 1
      %v1155 = vpop.permute.xlu0 %1154
      %v1157 = vsel %vm1048, 0.0, %v1155
      %v1158 = vadd.f32 %v1137, %v1157
      %v1159 = vadd.f32 %v1155, 0.0
      %1160 = vst [vmem:[%s602 + $0x10] sm:$0xff] %v1158
      %1161 = vst.msk [vmem:[%s602 + $0x18] sm:$0xff] %vm1048, %v1159
      %p1162 = scmp.lt.s32.totalorder %s30, 1
      %s1163 = scalar_select %p1162, %s30, 1
      %s1164 = smul.addr %s1163, 4
      %s1165 = smul.addr %s1164, 8
      %s1166 = scalar_lea.vmem %s19, %s1165
      // Predicated region
      $region97: #{convtasnet_forward.1} parent=95 // pred_check
        %p1167 = pneg %p452
      $region98: #{convtasnet_forward.1} parent=95 // pred_check_branch
        %1169 = sbr.rel (%p1167) target = $region100
      $region99: #{convtasnet_forward.1} parent=95 // pred_region
        _
      $region100: #{convtasnet_forward.1} parent=95 // pred_fallthru
        _
    $region96: #{convtasnet_forward.1} parent=5 // pred_fallthru
      _
    %p1170 = scmp.le.s32.totalorder 2, %s25
    // Predicated region
    $region101: #{convtasnet_forward.1} parent=5 // pred_check
      %p1171 = pneg %p1170
    $region102: #{convtasnet_forward.1} parent=5 // pred_check_branch
      %1173 = sbr.rel (%p1171) target = $region104
    $region103: #{convtasnet_forward.1} parent=5 // pred_region
      %s1174 = ssub.s32 %s25, 2
      // Predicated region
      $region105: #{convtasnet_forward.1} parent=103 // pred_check
        %p1175 = pneg %p458
      $region106: #{convtasnet_forward.1} parent=103 // pred_check_branch
        %1177 = sbr.rel (%p1175) target = $region108
      $region107: #{convtasnet_forward.1} parent=103 // pred_region
        %p1178 = scmp.lt.s32.totalorder %s31, 1
        %s1179 = scalar_select %p1178, %s31, 1
        %s1180 = smul.addr %s1179, 4
        %s1181 = smul.addr %s1180, 8
        %s1182 = scalar_lea.vmem %s19, %s1181
      $region108: #{convtasnet_forward.1} parent=103 // pred_fallthru
        _
    $region104: #{convtasnet_forward.1} parent=5 // pred_fallthru
      _
  $region6: #{convtasnet_forward.1} parent=0 // loop_footer
    %s29 = sadd.s32 1, %s25
  $region7: #{convtasnet_forward.1} parent=0 // loop_footer_branch
    %24 = sbr.rel target = $region3
  $region8: #{convtasnet_forward.1} parent=0 // loop_exit
    _

</llo_original>
